<compile_context>
chip_gen: v7x
topology: tpu7x:2x2x1
jax: 0.10.0
libtpu: 0.0.40
codegen_flags: <defaults>
</compile_context>

<pallas_src>
import jax
import jax.numpy as jnp
from jax.experimental import pallas as pl
from jax.experimental.pallas import tpu as pltpu

VOCAB = 128
EMBED = 128
HIDDEN = 128
SEQ = 8
BATCH = 2
N = BATCH * SEQ
LN_EPS = 1e-5  # torch.nn.LayerNorm default


def _layer_norm(x, gamma, beta):
    mu = jnp.mean(x, axis=-1, keepdims=True)
    xc = x - mu
    var = jnp.mean(xc * xc, axis=-1, keepdims=True)
    return xc * jax.lax.rsqrt(var + LN_EPS) * gamma + beta


def _sigmoid(z):
    # 0.5 * (1 + tanh(z / 2)) -> a single EUP tanh per gate (no exp + divide).
    return 0.5 + 0.5 * jnp.tanh(0.5 * z)


# ----------------------------------------------------------------------------
# One fused kernel: embed gather -> LN -> x@W_ih (batched) -> LSTM recurrence
#                   -> LN -> output Linear.
# ----------------------------------------------------------------------------
def fused_rnn_kernel(ids_ref, emb_ref, ge_ref, be_ref, wih_ref, whh_ref, b_ref,
                     gh_ref, bh_ref, wout_ref, bout_ref, out_ref):
    H = HIDDEN

    # --- embedding gather as a one-hot matmul (table resident in VMEM) -------
    ids = ids_ref[...]                                            # (N, 1) int32
    vocab_iota = jax.lax.broadcasted_iota(jnp.int32, (N, VOCAB), 1)
    one_hot = (vocab_iota == ids).astype(jnp.float32)             # (N, VOCAB)
    x = jnp.dot(one_hot, emb_ref[...],
                preferred_element_type=jnp.float32)               # (N, E)

    # --- embed LayerNorm ------------------------------------------------------
    xln = _layer_norm(x, ge_ref[0, :], be_ref[0, :])
    # TODO(synk): embed_dropout(p=0.1) is identity in eval mode; training-mode
    # dropout masking is omitted.

    # --- non-recurrent input projection hoisted out of the time loop ---------
    gates_x = (jnp.dot(xln, wih_ref[...], preferred_element_type=jnp.float32)
               + b_ref[0, :])                                     # (N, 4H)

    whh = whh_ref[...]                                            # (H, 4H) resident

    # --- LSTM recurrence, fully unrolled (static T=8, all offsets constant) --
    h = jnp.zeros((BATCH, H), jnp.float32)
    c = jnp.zeros((BATCH, H), jnp.float32)
    h_rows = [None] * N                                           # batch-major rows
    for t in range(SEQ):
        # rows {b*SEQ + t} of the precomputed input gates (batch-major layout)
        gx_t = jnp.concatenate(
            [gates_x[b * SEQ + t:b * SEQ + t + 1, :] for b in range(BATCH)],
            axis=0)                                               # (B, 4H)
        gates = gx_t + jnp.dot(h, whh, preferred_element_type=jnp.float32)
        i_g = _sigmoid(gates[:, 0 * H:1 * H])                     # input gate
        f_g = _sigmoid(gates[:, 1 * H:2 * H])                     # forget gate
        g_g = jnp.tanh(gates[:, 2 * H:3 * H])                     # cell candidate
        o_g = _sigmoid(gates[:, 3 * H:4 * H])                     # output gate
        c = f_g * c + i_g * g_g
        h = o_g * jnp.tanh(c)
        for b in range(BATCH):
            h_rows[b * SEQ + t] = h[b:b + 1, :]

    hs = jnp.concatenate(h_rows, axis=0)                          # (N, H) batch-major

    # --- rnn LayerNorm + output Linear, one lane-dense (N, V) store ----------
    hln = _layer_norm(hs, gh_ref[0, :], bh_ref[0, :])
    out_ref[...] = (jnp.dot(hln, wout_ref[...],
                            preferred_element_type=jnp.float32)
                    + bout_ref[0, :])


def _full(shape):
    # full-array block, constant index map (grid=(1,))
    return pl.BlockSpec(shape, lambda i, _s=shape: (0,) * len(_s))


def run_fused_rnn(ids_flat, params):
    return pl.pallas_call(
        fused_rnn_kernel,
        out_shape=jax.ShapeDtypeStruct((N, VOCAB), jnp.float32),
        grid_spec=pltpu.PrefetchScalarGridSpec(
            num_scalar_prefetch=0,
            grid=(1,),
            in_specs=[
                _full((N, 1)),                       # ids (batch-major flat)
                _full((VOCAB, EMBED)),               # embedding table
                _full((1, EMBED)),                   # embed LN gamma
                _full((1, EMBED)),                   # embed LN beta
                _full((EMBED, 4 * HIDDEN)),          # W_ih (transposed for x @ W)
                _full((HIDDEN, 4 * HIDDEN)),         # W_hh
                _full((1, 4 * HIDDEN)),              # combined LSTM bias
                _full((1, HIDDEN)),                  # rnn LN gamma
                _full((1, HIDDEN)),                  # rnn LN beta
                _full((HIDDEN, VOCAB)),              # output Linear weight
                _full((1, VOCAB)),                   # output Linear bias
            ],
            out_specs=_full((N, VOCAB)),
        ),
        compiler_params=pltpu.CompilerParams(
            dimension_semantics=("arbitrary",)),
    )(ids_flat, params["emb"], params["gamma_e"], params["beta_e"],
      params["w_ih"], params["w_hh"], params["b"],
      params["gamma_h"], params["beta_h"], params["w_out"], params["b_out"])


# ----------------------------------------------------------------------------
# Parameters (deterministic, shapes match the nn.Module's __init__)
# ----------------------------------------------------------------------------
def init_params(key):
    ks = jax.random.split(key, 5)
    emb = jax.random.normal(ks[0], (VOCAB, EMBED), jnp.float32) * 0.08
    # LSTM weights, PyTorch gate order (i, f, g, o), stored transposed for x @ W
    w_ih = jax.random.normal(ks[1], (EMBED, 4 * HIDDEN), jnp.float32) * 0.06
    w_hh = jax.random.normal(ks[2], (HIDDEN, 4 * HIDDEN), jnp.float32) * 0.06
    # biases zero; forget-gate bias set to 1 in both b_ih and b_hh -> 2 combined
    b = jnp.zeros((1, 4 * HIDDEN), jnp.float32)
    b = b.at[:, HIDDEN:2 * HIDDEN].set(2.0)
    gamma_e = jnp.ones((1, EMBED), jnp.float32)
    beta_e = jnp.zeros((1, EMBED), jnp.float32)
    gamma_h = jnp.ones((1, HIDDEN), jnp.float32)
    beta_h = jnp.zeros((1, HIDDEN), jnp.float32)
    w_out = jax.random.normal(ks[3], (HIDDEN, VOCAB), jnp.float32) * 0.08
    b_out = jax.random.normal(ks[4], (1, VOCAB), jnp.float32) * 0.01
    return dict(emb=emb, w_ih=w_ih, w_hh=w_hh, b=b,
                gamma_e=gamma_e, beta_e=beta_e,
                gamma_h=gamma_h, beta_h=beta_h,
                w_out=w_out, b_out=b_out)


@jax.jit
def rnn_model_forward(params, ids):
    # ids: (B, T) int32. Contiguous reshape only (no gather / transpose glue).
    ids_flat = ids.astype(jnp.int32).reshape(N, 1)
    logits = run_fused_rnn(ids_flat, params)          # (B*T, V), batch-major
    return logits.reshape(BATCH, SEQ, VOCAB)


# ----------------------------------------------------------------------------
# Pure-JAX reference for a correctness sanity check.
# ----------------------------------------------------------------------------
def rnn_model_ref(params, ids):
    def ln(x, g, b):
        mu = jnp.mean(x, -1, keepdims=True)
        var = jnp.mean((x - mu) ** 2, -1, keepdims=True)
        return (x - mu) / jnp.sqrt(var + LN_EPS) * g[0] + b[0]

    emb = jnp.take(params["emb"], ids, axis=0)
    x = ln(emb, params["gamma_e"], params["beta_e"])

    def step(carry, x_t):
        h, c = carry
        gates = x_t @ params["w_ih"] + h @ params["w_hh"] + params["b"][0]
        i = jax.nn.sigmoid(gates[:, :HIDDEN])
        f = jax.nn.sigmoid(gates[:, HIDDEN:2 * HIDDEN])
        g = jnp.tanh(gates[:, 2 * HIDDEN:3 * HIDDEN])
        o = jax.nn.sigmoid(gates[:, 3 * HIDDEN:])
        c = f * c + i * g
        h = o * jnp.tanh(c)
        return (h, c), h

    h0 = jnp.zeros((BATCH, HIDDEN), jnp.float32)
    _, hs = jax.lax.scan(step, (h0, h0), jnp.transpose(x, (1, 0, 2)))
    hs = jnp.transpose(hs, (1, 0, 2))                    # (B, T, H)
    hln = ln(hs, params["gamma_h"], params["beta_h"])
    return hln @ params["w_out"] + params["b_out"][0]


if __name__ == "__main__":
    key = jax.random.PRNGKey(0)
    pkey, dkey = jax.random.split(key)
    params = init_params(pkey)
    ids = jax.random.randint(dkey, (BATCH, SEQ), 0, VOCAB, dtype=jnp.int32)

    logits = rnn_model_forward(params, ids)
    logits = jax.block_until_ready(logits)

    ref = rnn_model_ref(params, ids)
    assert logits.shape == (BATCH, SEQ, VOCAB)
    assert jnp.allclose(logits, ref, rtol=2e-3, atol=2e-3), "mismatch vs JAX reference"

    print("KERNEL_OK")
</pallas_src>

<mosaic_0001>
module attributes {stable_mosaic.version = 11 : i64} {
  func.func @fused_rnn_kernel(%arg0: i32, %arg1: memref<16x1xi32, #tpu.memory_space<vmem>>, %arg2: memref<128x128xf32, #tpu.memory_space<vmem>>, %arg3: memref<1x128xf32, #tpu.memory_space<vmem>>, %arg4: memref<1x128xf32, #tpu.memory_space<vmem>>, %arg5: memref<128x512xf32, #tpu.memory_space<vmem>>, %arg6: memref<128x512xf32, #tpu.memory_space<vmem>>, %arg7: memref<1x512xf32, #tpu.memory_space<vmem>>, %arg8: memref<1x128xf32, #tpu.memory_space<vmem>>, %arg9: memref<1x128xf32, #tpu.memory_space<vmem>>, %arg10: memref<128x128xf32, #tpu.memory_space<vmem>>, %arg11: memref<1x128xf32, #tpu.memory_space<vmem>>, %arg12: memref<16x128xf32, #tpu.memory_space<vmem>>) attributes {dimension_semantics = [#tpu.dimension_semantics<arbitrary>], iteration_bounds = array<i64: 1>, scalar_prefetch = 0 : i64, scratch_operands = 0 : i64, tpu.core_type = #tpu.core_type<tc>, window_params = [{pipeline_mode = #tpu.pipeline_mode<synchronous>, transform_indices = @transform_0, window_bounds = array<i64: 16, 1>}, {pipeline_mode = #tpu.pipeline_mode<synchronous>, transform_indices = @transform_1, window_bounds = array<i64: 128, 128>}, {pipeline_mode = #tpu.pipeline_mode<synchronous>, transform_indices = @transform_2, window_bounds = array<i64: 1, 128>}, {pipeline_mode = #tpu.pipeline_mode<synchronous>, transform_indices = @transform_3, window_bounds = array<i64: 1, 128>}, {pipeline_mode = #tpu.pipeline_mode<synchronous>, transform_indices = @transform_4, window_bounds = array<i64: 128, 512>}, {pipeline_mode = #tpu.pipeline_mode<synchronous>, transform_indices = @transform_5, window_bounds = array<i64: 128, 512>}, {pipeline_mode = #tpu.pipeline_mode<synchronous>, transform_indices = @transform_6, window_bounds = array<i64: 1, 512>}, {pipeline_mode = #tpu.pipeline_mode<synchronous>, transform_indices = @transform_7, window_bounds = array<i64: 1, 128>}, {pipeline_mode = #tpu.pipeline_mode<synchronous>, transform_indices = @transform_8, window_bounds = array<i64: 1, 128>}, {pipeline_mode = #tpu.pipeline_mode<synchronous>, transform_indices = @transform_9, window_bounds = array<i64: 128, 128>}, {pipeline_mode = #tpu.pipeline_mode<synchronous>, transform_indices = @transform_10, window_bounds = array<i64: 1, 128>}, {pipeline_mode = #tpu.pipeline_mode<synchronous>, transform_indices = @transform_11, window_bounds = array<i64: 16, 128>}]} {
    %c0 = arith.constant 0 : index
    %c0_0 = arith.constant 0 : index
    %0 = vector.load %arg1[%c0, %c0_0] : memref<16x1xi32, #tpu.memory_space<vmem>>, vector<16x1xi32>
    %1 = tpu.iota {dimensions = array<i32: 1>} : vector<16x128xi32>
    %2 = vector.broadcast %0 : vector<16x1xi32> to vector<16x128xi32>
    %3 = arith.cmpi eq, %1, %2 : vector<16x128xi32>
    %4 = arith.extui %3 : vector<16x128xi1> to vector<16x128xi32>
    %5 = arith.sitofp %4 : vector<16x128xi32> to vector<16x128xf32>
    %c0_1 = arith.constant 0 : index
    %c0_2 = arith.constant 0 : index
    %6 = vector.load %arg2[%c0_1, %c0_2] : memref<128x128xf32, #tpu.memory_space<vmem>>, vector<128x128xf32>
    %cst = arith.constant dense<0.000000e+00> : vector<16x128xf32>
    %7 = tpu.matmul %5, %6, %cst {dimension_numbers = #tpu.dot_dimension_numbers<[1], [0], [0], [1], [0, 0, 1, 1], [], []>} : vector<16x128xf32>, vector<128x128xf32>, vector<16x128xf32> -> vector<16x128xf32>
    %c0_3 = arith.constant 0 : index
    %c0_4 = arith.constant 0 : index
    %8 = vector.load %arg3[%c0_3, %c0_4] : memref<1x128xf32, #tpu.memory_space<vmem>>, vector<1x128xf32>
    %9 = vector.shape_cast %8 : vector<1x128xf32> to vector<128xf32>
    %c0_5 = arith.constant 0 : index
    %c0_6 = arith.constant 0 : index
    %10 = vector.load %arg4[%c0_5, %c0_6] : memref<1x128xf32, #tpu.memory_space<vmem>>, vector<1x128xf32>
    %11 = vector.shape_cast %10 : vector<1x128xf32> to vector<128xf32>
    %cst_7 = arith.constant dense<0.000000e+00> : vector<16xf32>
    %12 = vector.multi_reduction <add>, %7, %cst_7 [1] : vector<16x128xf32> to vector<16xf32>
    %13 = vector.shape_cast %12 : vector<16xf32> to vector<16x1xf32>
    %cst_8 = arith.constant 1.280000e+02 : f32
    %14 = vector.broadcast %cst_8 : f32 to vector<16x1xf32>
    %15 = arith.divf %13, %14 : vector<16x1xf32>
    %16 = vector.broadcast %15 : vector<16x1xf32> to vector<16x128xf32>
    %17 = arith.subf %7, %16 : vector<16x128xf32>
    %18 = arith.mulf %17, %17 : vector<16x128xf32>
    %cst_9 = arith.constant dense<0.000000e+00> : vector<16xf32>
    %19 = vector.multi_reduction <add>, %18, %cst_9 [1] : vector<16x128xf32> to vector<16xf32>
    %20 = vector.shape_cast %19 : vector<16xf32> to vector<16x1xf32>
    %cst_10 = arith.constant 1.280000e+02 : f32
    %21 = vector.broadcast %cst_10 : f32 to vector<16x1xf32>
    %22 = arith.divf %20, %21 : vector<16x1xf32>
    %cst_11 = arith.constant 9.99999974E-6 : f32
    %23 = vector.broadcast %cst_11 : f32 to vector<16x1xf32>
    %24 = arith.addf %22, %23 : vector<16x1xf32>
    %25 = math.rsqrt %24 : vector<16x1xf32>
    %26 = vector.broadcast %25 : vector<16x1xf32> to vector<16x128xf32>
    %27 = arith.mulf %17, %26 : vector<16x128xf32>
    %28 = vector.shape_cast %9 : vector<128xf32> to vector<1x128xf32>
    %29 = vector.broadcast %28 : vector<1x128xf32> to vector<16x128xf32>
    %30 = arith.mulf %27, %29 : vector<16x128xf32>
    %31 = vector.shape_cast %11 : vector<128xf32> to vector<1x128xf32>
    %32 = vector.broadcast %31 : vector<1x128xf32> to vector<16x128xf32>
    %33 = arith.addf %30, %32 : vector<16x128xf32>
    %c0_12 = arith.constant 0 : index
    %c0_13 = arith.constant 0 : index
    %34 = vector.load %arg5[%c0_12, %c0_13] : memref<128x512xf32, #tpu.memory_space<vmem>>, vector<128x512xf32>
    %cst_14 = arith.constant dense<0.000000e+00> : vector<16x512xf32>
    %35 = tpu.matmul %33, %34, %cst_14 {dimension_numbers = #tpu.dot_dimension_numbers<[1], [0], [0], [1], [0, 0, 1, 1], [], []>} : vector<16x128xf32>, vector<128x512xf32>, vector<16x512xf32> -> vector<16x512xf32>
    %c0_15 = arith.constant 0 : index
    %c0_16 = arith.constant 0 : index
    %36 = vector.load %arg7[%c0_15, %c0_16] : memref<1x512xf32, #tpu.memory_space<vmem>>, vector<1x512xf32>
    %37 = vector.shape_cast %36 : vector<1x512xf32> to vector<512xf32>
    %38 = vector.shape_cast %37 : vector<512xf32> to vector<1x512xf32>
    %39 = vector.broadcast %38 : vector<1x512xf32> to vector<16x512xf32>
    %40 = arith.addf %35, %39 : vector<16x512xf32>
    %c0_17 = arith.constant 0 : index
    %c0_18 = arith.constant 0 : index
    %41 = vector.load %arg6[%c0_17, %c0_18] : memref<128x512xf32, #tpu.memory_space<vmem>>, vector<128x512xf32>
    %cst_19 = arith.constant 0.000000e+00 : f32
    %42 = vector.broadcast %cst_19 : f32 to vector<2x128xf32>
    %cst_20 = arith.constant 0.000000e+00 : f32
    %43 = vector.broadcast %cst_20 : f32 to vector<2x128xf32>
    %44 = vector.extract_strided_slice %40 {offsets = [0, 0], sizes = [1, 512], strides = [1, 1]} : vector<16x512xf32> to vector<1x512xf32>
    %45 = vector.extract_strided_slice %40 {offsets = [8, 0], sizes = [1, 512], strides = [1, 1]} : vector<16x512xf32> to vector<1x512xf32>
    %46 = tpu.concatenate %44, %45 in 0 : vector<1x512xf32>, vector<1x512xf32> -> vector<2x512xf32>
    %cst_21 = arith.constant dense<0.000000e+00> : vector<2x512xf32>
    %47 = tpu.matmul %42, %41, %cst_21 {dimension_numbers = #tpu.dot_dimension_numbers<[1], [0], [0], [1], [0, 0, 1, 1], [], []>} : vector<2x128xf32>, vector<128x512xf32>, vector<2x512xf32> -> vector<2x512xf32>
    %48 = arith.addf %46, %47 : vector<2x512xf32>
    %49 = vector.extract_strided_slice %48 {offsets = [0, 0], sizes = [2, 128], strides = [1, 1]} : vector<2x512xf32> to vector<2x128xf32>
    %cst_22 = arith.constant 5.000000e-01 : f32
    %50 = vector.broadcast %cst_22 : f32 to vector<2x128xf32>
    %51 = arith.mulf %50, %49 : vector<2x128xf32>
    %52 = math.tanh %51 : vector<2x128xf32>
    %cst_23 = arith.constant 5.000000e-01 : f32
    %53 = vector.broadcast %cst_23 : f32 to vector<2x128xf32>
    %54 = arith.mulf %53, %52 : vector<2x128xf32>
    %cst_24 = arith.constant 5.000000e-01 : f32
    %55 = vector.broadcast %cst_24 : f32 to vector<2x128xf32>
    %56 = arith.addf %55, %54 : vector<2x128xf32>
    %57 = vector.extract_strided_slice %48 {offsets = [0, 128], sizes = [2, 128], strides = [1, 1]} : vector<2x512xf32> to vector<2x128xf32>
    %cst_25 = arith.constant 5.000000e-01 : f32
    %58 = vector.broadcast %cst_25 : f32 to vector<2x128xf32>
    %59 = arith.mulf %58, %57 : vector<2x128xf32>
    %60 = math.tanh %59 : vector<2x128xf32>
    %cst_26 = arith.constant 5.000000e-01 : f32
    %61 = vector.broadcast %cst_26 : f32 to vector<2x128xf32>
    %62 = arith.mulf %61, %60 : vector<2x128xf32>
    %cst_27 = arith.constant 5.000000e-01 : f32
    %63 = vector.broadcast %cst_27 : f32 to vector<2x128xf32>
    %64 = arith.addf %63, %62 : vector<2x128xf32>
    %65 = vector.extract_strided_slice %48 {offsets = [0, 256], sizes = [2, 128], strides = [1, 1]} : vector<2x512xf32> to vector<2x128xf32>
    %66 = math.tanh %65 : vector<2x128xf32>
    %67 = vector.extract_strided_slice %48 {offsets = [0, 384], sizes = [2, 128], strides = [1, 1]} : vector<2x512xf32> to vector<2x128xf32>
    %cst_28 = arith.constant 5.000000e-01 : f32
    %68 = vector.broadcast %cst_28 : f32 to vector<2x128xf32>
    %69 = arith.mulf %68, %67 : vector<2x128xf32>
    %70 = math.tanh %69 : vector<2x128xf32>
    %cst_29 = arith.constant 5.000000e-01 : f32
    %71 = vector.broadcast %cst_29 : f32 to vector<2x128xf32>
    %72 = arith.mulf %71, %70 : vector<2x128xf32>
    %cst_30 = arith.constant 5.000000e-01 : f32
    %73 = vector.broadcast %cst_30 : f32 to vector<2x128xf32>
    %74 = arith.addf %73, %72 : vector<2x128xf32>
    %75 = arith.mulf %64, %43 : vector<2x128xf32>
    %76 = arith.mulf %56, %66 : vector<2x128xf32>
    %77 = arith.addf %75, %76 : vector<2x128xf32>
    %78 = math.tanh %77 : vector<2x128xf32>
    %79 = arith.mulf %74, %78 : vector<2x128xf32>
    %80 = vector.extract_strided_slice %79 {offsets = [0, 0], sizes = [1, 128], strides = [1, 1]} : vector<2x128xf32> to vector<1x128xf32>
    %81 = vector.extract_strided_slice %79 {offsets = [1, 0], sizes = [1, 128], strides = [1, 1]} : vector<2x128xf32> to vector<1x128xf32>
    %82 = vector.extract_strided_slice %40 {offsets = [1, 0], sizes = [1, 512], strides = [1, 1]} : vector<16x512xf32> to vector<1x512xf32>
    %83 = vector.extract_strided_slice %40 {offsets = [9, 0], sizes = [1, 512], strides = [1, 1]} : vector<16x512xf32> to vector<1x512xf32>
    %84 = tpu.concatenate %82, %83 in 0 : vector<1x512xf32>, vector<1x512xf32> -> vector<2x512xf32>
    %cst_31 = arith.constant dense<0.000000e+00> : vector<2x512xf32>
    %85 = tpu.matmul %79, %41, %cst_31 {dimension_numbers = #tpu.dot_dimension_numbers<[1], [0], [0], [1], [0, 0, 1, 1], [], []>} : vector<2x128xf32>, vector<128x512xf32>, vector<2x512xf32> -> vector<2x512xf32>
    %86 = arith.addf %84, %85 : vector<2x512xf32>
    %87 = vector.extract_strided_slice %86 {offsets = [0, 0], sizes = [2, 128], strides = [1, 1]} : vector<2x512xf32> to vector<2x128xf32>
    %cst_32 = arith.constant 5.000000e-01 : f32
    %88 = vector.broadcast %cst_32 : f32 to vector<2x128xf32>
    %89 = arith.mulf %88, %87 : vector<2x128xf32>
    %90 = math.tanh %89 : vector<2x128xf32>
    %cst_33 = arith.constant 5.000000e-01 : f32
    %91 = vector.broadcast %cst_33 : f32 to vector<2x128xf32>
    %92 = arith.mulf %91, %90 : vector<2x128xf32>
    %cst_34 = arith.constant 5.000000e-01 : f32
    %93 = vector.broadcast %cst_34 : f32 to vector<2x128xf32>
    %94 = arith.addf %93, %92 : vector<2x128xf32>
    %95 = vector.extract_strided_slice %86 {offsets = [0, 128], sizes = [2, 128], strides = [1, 1]} : vector<2x512xf32> to vector<2x128xf32>
    %cst_35 = arith.constant 5.000000e-01 : f32
    %96 = vector.broadcast %cst_35 : f32 to vector<2x128xf32>
    %97 = arith.mulf %96, %95 : vector<2x128xf32>
    %98 = math.tanh %97 : vector<2x128xf32>
    %cst_36 = arith.constant 5.000000e-01 : f32
    %99 = vector.broadcast %cst_36 : f32 to vector<2x128xf32>
    %100 = arith.mulf %99, %98 : vector<2x128xf32>
    %cst_37 = arith.constant 5.000000e-01 : f32
    %101 = vector.broadcast %cst_37 : f32 to vector<2x128xf32>
    %102 = arith.addf %101, %100 : vector<2x128xf32>
    %103 = vector.extract_strided_slice %86 {offsets = [0, 256], sizes = [2, 128], strides = [1, 1]} : vector<2x512xf32> to vector<2x128xf32>
    %104 = math.tanh %103 : vector<2x128xf32>
    %105 = vector.extract_strided_slice %86 {offsets = [0, 384], sizes = [2, 128], strides = [1, 1]} : vector<2x512xf32> to vector<2x128xf32>
    %cst_38 = arith.constant 5.000000e-01 : f32
    %106 = vector.broadcast %cst_38 : f32 to vector<2x128xf32>
    %107 = arith.mulf %106, %105 : vector<2x128xf32>
    %108 = math.tanh %107 : vector<2x128xf32>
    %cst_39 = arith.constant 5.000000e-01 : f32
    %109 = vector.broadcast %cst_39 : f32 to vector<2x128xf32>
    %110 = arith.mulf %109, %108 : vector<2x128xf32>
    %cst_40 = arith.constant 5.000000e-01 : f32
    %111 = vector.broadcast %cst_40 : f32 to vector<2x128xf32>
    %112 = arith.addf %111, %110 : vector<2x128xf32>
    %113 = arith.mulf %102, %77 : vector<2x128xf32>
    %114 = arith.mulf %94, %104 : vector<2x128xf32>
    %115 = arith.addf %113, %114 : vector<2x128xf32>
    %116 = math.tanh %115 : vector<2x128xf32>
    %117 = arith.mulf %112, %116 : vector<2x128xf32>
    %118 = vector.extract_strided_slice %117 {offsets = [0, 0], sizes = [1, 128], strides = [1, 1]} : vector<2x128xf32> to vector<1x128xf32>
    %119 = vector.extract_strided_slice %117 {offsets = [1, 0], sizes = [1, 128], strides = [1, 1]} : vector<2x128xf32> to vector<1x128xf32>
    %120 = vector.extract_strided_slice %40 {offsets = [2, 0], sizes = [1, 512], strides = [1, 1]} : vector<16x512xf32> to vector<1x512xf32>
    %121 = vector.extract_strided_slice %40 {offsets = [10, 0], sizes = [1, 512], strides = [1, 1]} : vector<16x512xf32> to vector<1x512xf32>
    %122 = tpu.concatenate %120, %121 in 0 : vector<1x512xf32>, vector<1x512xf32> -> vector<2x512xf32>
    %cst_41 = arith.constant dense<0.000000e+00> : vector<2x512xf32>
    %123 = tpu.matmul %117, %41, %cst_41 {dimension_numbers = #tpu.dot_dimension_numbers<[1], [0], [0], [1], [0, 0, 1, 1], [], []>} : vector<2x128xf32>, vector<128x512xf32>, vector<2x512xf32> -> vector<2x512xf32>
    %124 = arith.addf %122, %123 : vector<2x512xf32>
    %125 = vector.extract_strided_slice %124 {offsets = [0, 0], sizes = [2, 128], strides = [1, 1]} : vector<2x512xf32> to vector<2x128xf32>
    %cst_42 = arith.constant 5.000000e-01 : f32
    %126 = vector.broadcast %cst_42 : f32 to vector<2x128xf32>
    %127 = arith.mulf %126, %125 : vector<2x128xf32>
    %128 = math.tanh %127 : vector<2x128xf32>
    %cst_43 = arith.constant 5.000000e-01 : f32
    %129 = vector.broadcast %cst_43 : f32 to vector<2x128xf32>
    %130 = arith.mulf %129, %128 : vector<2x128xf32>
    %cst_44 = arith.constant 5.000000e-01 : f32
    %131 = vector.broadcast %cst_44 : f32 to vector<2x128xf32>
    %132 = arith.addf %131, %130 : vector<2x128xf32>
    %133 = vector.extract_strided_slice %124 {offsets = [0, 128], sizes = [2, 128], strides = [1, 1]} : vector<2x512xf32> to vector<2x128xf32>
    %cst_45 = arith.constant 5.000000e-01 : f32
    %134 = vector.broadcast %cst_45 : f32 to vector<2x128xf32>
    %135 = arith.mulf %134, %133 : vector<2x128xf32>
    %136 = math.tanh %135 : vector<2x128xf32>
    %cst_46 = arith.constant 5.000000e-01 : f32
    %137 = vector.broadcast %cst_46 : f32 to vector<2x128xf32>
    %138 = arith.mulf %137, %136 : vector<2x128xf32>
    %cst_47 = arith.constant 5.000000e-01 : f32
    %139 = vector.broadcast %cst_47 : f32 to vector<2x128xf32>
    %140 = arith.addf %139, %138 : vector<2x128xf32>
    %141 = vector.extract_strided_slice %124 {offsets = [0, 256], sizes = [2, 128], strides = [1, 1]} : vector<2x512xf32> to vector<2x128xf32>
    %142 = math.tanh %141 : vector<2x128xf32>
    %143 = vector.extract_strided_slice %124 {offsets = [0, 384], sizes = [2, 128], strides = [1, 1]} : vector<2x512xf32> to vector<2x128xf32>
    %cst_48 = arith.constant 5.000000e-01 : f32
    %144 = vector.broadcast %cst_48 : f32 to vector<2x128xf32>
    %145 = arith.mulf %144, %143 : vector<2x128xf32>
    %146 = math.tanh %145 : vector<2x128xf32>
    %cst_49 = arith.constant 5.000000e-01 : f32
    %147 = vector.broadcast %cst_49 : f32 to vector<2x128xf32>
    %148 = arith.mulf %147, %146 : vector<2x128xf32>
    %cst_50 = arith.constant 5.000000e-01 : f32
    %149 = vector.broadcast %cst_50 : f32 to vector<2x128xf32>
    %150 = arith.addf %149, %148 : vector<2x128xf32>
    %151 = arith.mulf %140, %115 : vector<2x128xf32>
    %152 = arith.mulf %132, %142 : vector<2x128xf32>
    %153 = arith.addf %151, %152 : vector<2x128xf32>
    %154 = math.tanh %153 : vector<2x128xf32>
    %155 = arith.mulf %150, %154 : vector<2x128xf32>
    %156 = vector.extract_strided_slice %155 {offsets = [0, 0], sizes = [1, 128], strides = [1, 1]} : vector<2x128xf32> to vector<1x128xf32>
    %157 = vector.extract_strided_slice %155 {offsets = [1, 0], sizes = [1, 128], strides = [1, 1]} : vector<2x128xf32> to vector<1x128xf32>
    %158 = vector.extract_strided_slice %40 {offsets = [3, 0], sizes = [1, 512], strides = [1, 1]} : vector<16x512xf32> to vector<1x512xf32>
    %159 = vector.extract_strided_slice %40 {offsets = [11, 0], sizes = [1, 512], strides = [1, 1]} : vector<16x512xf32> to vector<1x512xf32>
    %160 = tpu.concatenate %158, %159 in 0 : vector<1x512xf32>, vector<1x512xf32> -> vector<2x512xf32>
    %cst_51 = arith.constant dense<0.000000e+00> : vector<2x512xf32>
    %161 = tpu.matmul %155, %41, %cst_51 {dimension_numbers = #tpu.dot_dimension_numbers<[1], [0], [0], [1], [0, 0, 1, 1], [], []>} : vector<2x128xf32>, vector<128x512xf32>, vector<2x512xf32> -> vector<2x512xf32>
    %162 = arith.addf %160, %161 : vector<2x512xf32>
    %163 = vector.extract_strided_slice %162 {offsets = [0, 0], sizes = [2, 128], strides = [1, 1]} : vector<2x512xf32> to vector<2x128xf32>
    %cst_52 = arith.constant 5.000000e-01 : f32
    %164 = vector.broadcast %cst_52 : f32 to vector<2x128xf32>
    %165 = arith.mulf %164, %163 : vector<2x128xf32>
    %166 = math.tanh %165 : vector<2x128xf32>
    %cst_53 = arith.constant 5.000000e-01 : f32
    %167 = vector.broadcast %cst_53 : f32 to vector<2x128xf32>
    %168 = arith.mulf %167, %166 : vector<2x128xf32>
    %cst_54 = arith.constant 5.000000e-01 : f32
    %169 = vector.broadcast %cst_54 : f32 to vector<2x128xf32>
    %170 = arith.addf %169, %168 : vector<2x128xf32>
    %171 = vector.extract_strided_slice %162 {offsets = [0, 128], sizes = [2, 128], strides = [1, 1]} : vector<2x512xf32> to vector<2x128xf32>
    %cst_55 = arith.constant 5.000000e-01 : f32
    %172 = vector.broadcast %cst_55 : f32 to vector<2x128xf32>
    %173 = arith.mulf %172, %171 : vector<2x128xf32>
    %174 = math.tanh %173 : vector<2x128xf32>
    %cst_56 = arith.constant 5.000000e-01 : f32
    %175 = vector.broadcast %cst_56 : f32 to vector<2x128xf32>
    %176 = arith.mulf %175, %174 : vector<2x128xf32>
    %cst_57 = arith.constant 5.000000e-01 : f32
    %177 = vector.broadcast %cst_57 : f32 to vector<2x128xf32>
    %178 = arith.addf %177, %176 : vector<2x128xf32>
    %179 = vector.extract_strided_slice %162 {offsets = [0, 256], sizes = [2, 128], strides = [1, 1]} : vector<2x512xf32> to vector<2x128xf32>
    %180 = math.tanh %179 : vector<2x128xf32>
    %181 = vector.extract_strided_slice %162 {offsets = [0, 384], sizes = [2, 128], strides = [1, 1]} : vector<2x512xf32> to vector<2x128xf32>
    %cst_58 = arith.constant 5.000000e-01 : f32
    %182 = vector.broadcast %cst_58 : f32 to vector<2x128xf32>
    %183 = arith.mulf %182, %181 : vector<2x128xf32>
    %184 = math.tanh %183 : vector<2x128xf32>
    %cst_59 = arith.constant 5.000000e-01 : f32
    %185 = vector.broadcast %cst_59 : f32 to vector<2x128xf32>
    %186 = arith.mulf %185, %184 : vector<2x128xf32>
    %cst_60 = arith.constant 5.000000e-01 : f32
    %187 = vector.broadcast %cst_60 : f32 to vector<2x128xf32>
    %188 = arith.addf %187, %186 : vector<2x128xf32>
    %189 = arith.mulf %178, %153 : vector<2x128xf32>
    %190 = arith.mulf %170, %180 : vector<2x128xf32>
    %191 = arith.addf %189, %190 : vector<2x128xf32>
    %192 = math.tanh %191 : vector<2x128xf32>
    %193 = arith.mulf %188, %192 : vector<2x128xf32>
    %194 = vector.extract_strided_slice %193 {offsets = [0, 0], sizes = [1, 128], strides = [1, 1]} : vector<2x128xf32> to vector<1x128xf32>
    %195 = vector.extract_strided_slice %193 {offsets = [1, 0], sizes = [1, 128], strides = [1, 1]} : vector<2x128xf32> to vector<1x128xf32>
    %196 = vector.extract_strided_slice %40 {offsets = [4, 0], sizes = [1, 512], strides = [1, 1]} : vector<16x512xf32> to vector<1x512xf32>
    %197 = vector.extract_strided_slice %40 {offsets = [12, 0], sizes = [1, 512], strides = [1, 1]} : vector<16x512xf32> to vector<1x512xf32>
    %198 = tpu.concatenate %196, %197 in 0 : vector<1x512xf32>, vector<1x512xf32> -> vector<2x512xf32>
    %cst_61 = arith.constant dense<0.000000e+00> : vector<2x512xf32>
    %199 = tpu.matmul %193, %41, %cst_61 {dimension_numbers = #tpu.dot_dimension_numbers<[1], [0], [0], [1], [0, 0, 1, 1], [], []>} : vector<2x128xf32>, vector<128x512xf32>, vector<2x512xf32> -> vector<2x512xf32>
    %200 = arith.addf %198, %199 : vector<2x512xf32>
    %201 = vector.extract_strided_slice %200 {offsets = [0, 0], sizes = [2, 128], strides = [1, 1]} : vector<2x512xf32> to vector<2x128xf32>
    %cst_62 = arith.constant 5.000000e-01 : f32
    %202 = vector.broadcast %cst_62 : f32 to vector<2x128xf32>
    %203 = arith.mulf %202, %201 : vector<2x128xf32>
    %204 = math.tanh %203 : vector<2x128xf32>
    %cst_63 = arith.constant 5.000000e-01 : f32
    %205 = vector.broadcast %cst_63 : f32 to vector<2x128xf32>
    %206 = arith.mulf %205, %204 : vector<2x128xf32>
    %cst_64 = arith.constant 5.000000e-01 : f32
    %207 = vector.broadcast %cst_64 : f32 to vector<2x128xf32>
    %208 = arith.addf %207, %206 : vector<2x128xf32>
    %209 = vector.extract_strided_slice %200 {offsets = [0, 128], sizes = [2, 128], strides = [1, 1]} : vector<2x512xf32> to vector<2x128xf32>
    %cst_65 = arith.constant 5.000000e-01 : f32
    %210 = vector.broadcast %cst_65 : f32 to vector<2x128xf32>
    %211 = arith.mulf %210, %209 : vector<2x128xf32>
    %212 = math.tanh %211 : vector<2x128xf32>
    %cst_66 = arith.constant 5.000000e-01 : f32
    %213 = vector.broadcast %cst_66 : f32 to vector<2x128xf32>
    %214 = arith.mulf %213, %212 : vector<2x128xf32>
    %cst_67 = arith.constant 5.000000e-01 : f32
    %215 = vector.broadcast %cst_67 : f32 to vector<2x128xf32>
    %216 = arith.addf %215, %214 : vector<2x128xf32>
    %217 = vector.extract_strided_slice %200 {offsets = [0, 256], sizes = [2, 128], strides = [1, 1]} : vector<2x512xf32> to vector<2x128xf32>
    %218 = math.tanh %217 : vector<2x128xf32>
    %219 = vector.extract_strided_slice %200 {offsets = [0, 384], sizes = [2, 128], strides = [1, 1]} : vector<2x512xf32> to vector<2x128xf32>
    %cst_68 = arith.constant 5.000000e-01 : f32
    %220 = vector.broadcast %cst_68 : f32 to vector<2x128xf32>
    %221 = arith.mulf %220, %219 : vector<2x128xf32>
    %222 = math.tanh %221 : vector<2x128xf32>
    %cst_69 = arith.constant 5.000000e-01 : f32
    %223 = vector.broadcast %cst_69 : f32 to vector<2x128xf32>
    %224 = arith.mulf %223, %222 : vector<2x128xf32>
    %cst_70 = arith.constant 5.000000e-01 : f32
    %225 = vector.broadcast %cst_70 : f32 to vector<2x128xf32>
    %226 = arith.addf %225, %224 : vector<2x128xf32>
    %227 = arith.mulf %216, %191 : vector<2x128xf32>
    %228 = arith.mulf %208, %218 : vector<2x128xf32>
    %229 = arith.addf %227, %228 : vector<2x128xf32>
    %230 = math.tanh %229 : vector<2x128xf32>
    %231 = arith.mulf %226, %230 : vector<2x128xf32>
    %232 = vector.extract_strided_slice %231 {offsets = [0, 0], sizes = [1, 128], strides = [1, 1]} : vector<2x128xf32> to vector<1x128xf32>
    %233 = vector.extract_strided_slice %231 {offsets = [1, 0], sizes = [1, 128], strides = [1, 1]} : vector<2x128xf32> to vector<1x128xf32>
    %234 = vector.extract_strided_slice %40 {offsets = [5, 0], sizes = [1, 512], strides = [1, 1]} : vector<16x512xf32> to vector<1x512xf32>
    %235 = vector.extract_strided_slice %40 {offsets = [13, 0], sizes = [1, 512], strides = [1, 1]} : vector<16x512xf32> to vector<1x512xf32>
    %236 = tpu.concatenate %234, %235 in 0 : vector<1x512xf32>, vector<1x512xf32> -> vector<2x512xf32>
    %cst_71 = arith.constant dense<0.000000e+00> : vector<2x512xf32>
    %237 = tpu.matmul %231, %41, %cst_71 {dimension_numbers = #tpu.dot_dimension_numbers<[1], [0], [0], [1], [0, 0, 1, 1], [], []>} : vector<2x128xf32>, vector<128x512xf32>, vector<2x512xf32> -> vector<2x512xf32>
    %238 = arith.addf %236, %237 : vector<2x512xf32>
    %239 = vector.extract_strided_slice %238 {offsets = [0, 0], sizes = [2, 128], strides = [1, 1]} : vector<2x512xf32> to vector<2x128xf32>
    %cst_72 = arith.constant 5.000000e-01 : f32
    %240 = vector.broadcast %cst_72 : f32 to vector<2x128xf32>
    %241 = arith.mulf %240, %239 : vector<2x128xf32>
    %242 = math.tanh %241 : vector<2x128xf32>
    %cst_73 = arith.constant 5.000000e-01 : f32
    %243 = vector.broadcast %cst_73 : f32 to vector<2x128xf32>
    %244 = arith.mulf %243, %242 : vector<2x128xf32>
    %cst_74 = arith.constant 5.000000e-01 : f32
    %245 = vector.broadcast %cst_74 : f32 to vector<2x128xf32>
    %246 = arith.addf %245, %244 : vector<2x128xf32>
    %247 = vector.extract_strided_slice %238 {offsets = [0, 128], sizes = [2, 128], strides = [1, 1]} : vector<2x512xf32> to vector<2x128xf32>
    %cst_75 = arith.constant 5.000000e-01 : f32
    %248 = vector.broadcast %cst_75 : f32 to vector<2x128xf32>
    %249 = arith.mulf %248, %247 : vector<2x128xf32>
    %250 = math.tanh %249 : vector<2x128xf32>
    %cst_76 = arith.constant 5.000000e-01 : f32
    %251 = vector.broadcast %cst_76 : f32 to vector<2x128xf32>
    %252 = arith.mulf %251, %250 : vector<2x128xf32>
    %cst_77 = arith.constant 5.000000e-01 : f32
    %253 = vector.broadcast %cst_77 : f32 to vector<2x128xf32>
    %254 = arith.addf %253, %252 : vector<2x128xf32>
    %255 = vector.extract_strided_slice %238 {offsets = [0, 256], sizes = [2, 128], strides = [1, 1]} : vector<2x512xf32> to vector<2x128xf32>
    %256 = math.tanh %255 : vector<2x128xf32>
    %257 = vector.extract_strided_slice %238 {offsets = [0, 384], sizes = [2, 128], strides = [1, 1]} : vector<2x512xf32> to vector<2x128xf32>
    %cst_78 = arith.constant 5.000000e-01 : f32
    %258 = vector.broadcast %cst_78 : f32 to vector<2x128xf32>
    %259 = arith.mulf %258, %257 : vector<2x128xf32>
    %260 = math.tanh %259 : vector<2x128xf32>
    %cst_79 = arith.constant 5.000000e-01 : f32
    %261 = vector.broadcast %cst_79 : f32 to vector<2x128xf32>
    %262 = arith.mulf %261, %260 : vector<2x128xf32>
    %cst_80 = arith.constant 5.000000e-01 : f32
    %263 = vector.broadcast %cst_80 : f32 to vector<2x128xf32>
    %264 = arith.addf %263, %262 : vector<2x128xf32>
    %265 = arith.mulf %254, %229 : vector<2x128xf32>
    %266 = arith.mulf %246, %256 : vector<2x128xf32>
    %267 = arith.addf %265, %266 : vector<2x128xf32>
    %268 = math.tanh %267 : vector<2x128xf32>
    %269 = arith.mulf %264, %268 : vector<2x128xf32>
    %270 = vector.extract_strided_slice %269 {offsets = [0, 0], sizes = [1, 128], strides = [1, 1]} : vector<2x128xf32> to vector<1x128xf32>
    %271 = vector.extract_strided_slice %269 {offsets = [1, 0], sizes = [1, 128], strides = [1, 1]} : vector<2x128xf32> to vector<1x128xf32>
    %272 = vector.extract_strided_slice %40 {offsets = [6, 0], sizes = [1, 512], strides = [1, 1]} : vector<16x512xf32> to vector<1x512xf32>
    %273 = vector.extract_strided_slice %40 {offsets = [14, 0], sizes = [1, 512], strides = [1, 1]} : vector<16x512xf32> to vector<1x512xf32>
    %274 = tpu.concatenate %272, %273 in 0 : vector<1x512xf32>, vector<1x512xf32> -> vector<2x512xf32>
    %cst_81 = arith.constant dense<0.000000e+00> : vector<2x512xf32>
    %275 = tpu.matmul %269, %41, %cst_81 {dimension_numbers = #tpu.dot_dimension_numbers<[1], [0], [0], [1], [0, 0, 1, 1], [], []>} : vector<2x128xf32>, vector<128x512xf32>, vector<2x512xf32> -> vector<2x512xf32>
    %276 = arith.addf %274, %275 : vector<2x512xf32>
    %277 = vector.extract_strided_slice %276 {offsets = [0, 0], sizes = [2, 128], strides = [1, 1]} : vector<2x512xf32> to vector<2x128xf32>
    %cst_82 = arith.constant 5.000000e-01 : f32
    %278 = vector.broadcast %cst_82 : f32 to vector<2x128xf32>
    %279 = arith.mulf %278, %277 : vector<2x128xf32>
    %280 = math.tanh %279 : vector<2x128xf32>
    %cst_83 = arith.constant 5.000000e-01 : f32
    %281 = vector.broadcast %cst_83 : f32 to vector<2x128xf32>
    %282 = arith.mulf %281, %280 : vector<2x128xf32>
    %cst_84 = arith.constant 5.000000e-01 : f32
    %283 = vector.broadcast %cst_84 : f32 to vector<2x128xf32>
    %284 = arith.addf %283, %282 : vector<2x128xf32>
    %285 = vector.extract_strided_slice %276 {offsets = [0, 128], sizes = [2, 128], strides = [1, 1]} : vector<2x512xf32> to vector<2x128xf32>
    %cst_85 = arith.constant 5.000000e-01 : f32
    %286 = vector.broadcast %cst_85 : f32 to vector<2x128xf32>
    %287 = arith.mulf %286, %285 : vector<2x128xf32>
    %288 = math.tanh %287 : vector<2x128xf32>
    %cst_86 = arith.constant 5.000000e-01 : f32
    %289 = vector.broadcast %cst_86 : f32 to vector<2x128xf32>
    %290 = arith.mulf %289, %288 : vector<2x128xf32>
    %cst_87 = arith.constant 5.000000e-01 : f32
    %291 = vector.broadcast %cst_87 : f32 to vector<2x128xf32>
    %292 = arith.addf %291, %290 : vector<2x128xf32>
    %293 = vector.extract_strided_slice %276 {offsets = [0, 256], sizes = [2, 128], strides = [1, 1]} : vector<2x512xf32> to vector<2x128xf32>
    %294 = math.tanh %293 : vector<2x128xf32>
    %295 = vector.extract_strided_slice %276 {offsets = [0, 384], sizes = [2, 128], strides = [1, 1]} : vector<2x512xf32> to vector<2x128xf32>
    %cst_88 = arith.constant 5.000000e-01 : f32
    %296 = vector.broadcast %cst_88 : f32 to vector<2x128xf32>
    %297 = arith.mulf %296, %295 : vector<2x128xf32>
    %298 = math.tanh %297 : vector<2x128xf32>
    %cst_89 = arith.constant 5.000000e-01 : f32
    %299 = vector.broadcast %cst_89 : f32 to vector<2x128xf32>
    %300 = arith.mulf %299, %298 : vector<2x128xf32>
    %cst_90 = arith.constant 5.000000e-01 : f32
    %301 = vector.broadcast %cst_90 : f32 to vector<2x128xf32>
    %302 = arith.addf %301, %300 : vector<2x128xf32>
    %303 = arith.mulf %292, %267 : vector<2x128xf32>
    %304 = arith.mulf %284, %294 : vector<2x128xf32>
    %305 = arith.addf %303, %304 : vector<2x128xf32>
    %306 = math.tanh %305 : vector<2x128xf32>
    %307 = arith.mulf %302, %306 : vector<2x128xf32>
    %308 = vector.extract_strided_slice %307 {offsets = [0, 0], sizes = [1, 128], strides = [1, 1]} : vector<2x128xf32> to vector<1x128xf32>
    %309 = vector.extract_strided_slice %307 {offsets = [1, 0], sizes = [1, 128], strides = [1, 1]} : vector<2x128xf32> to vector<1x128xf32>
    %310 = vector.extract_strided_slice %40 {offsets = [7, 0], sizes = [1, 512], strides = [1, 1]} : vector<16x512xf32> to vector<1x512xf32>
    %311 = vector.extract_strided_slice %40 {offsets = [15, 0], sizes = [1, 512], strides = [1, 1]} : vector<16x512xf32> to vector<1x512xf32>
    %312 = tpu.concatenate %310, %311 in 0 : vector<1x512xf32>, vector<1x512xf32> -> vector<2x512xf32>
    %cst_91 = arith.constant dense<0.000000e+00> : vector<2x512xf32>
    %313 = tpu.matmul %307, %41, %cst_91 {dimension_numbers = #tpu.dot_dimension_numbers<[1], [0], [0], [1], [0, 0, 1, 1], [], []>} : vector<2x128xf32>, vector<128x512xf32>, vector<2x512xf32> -> vector<2x512xf32>
    %314 = arith.addf %312, %313 : vector<2x512xf32>
    %315 = vector.extract_strided_slice %314 {offsets = [0, 0], sizes = [2, 128], strides = [1, 1]} : vector<2x512xf32> to vector<2x128xf32>
    %cst_92 = arith.constant 5.000000e-01 : f32
    %316 = vector.broadcast %cst_92 : f32 to vector<2x128xf32>
    %317 = arith.mulf %316, %315 : vector<2x128xf32>
    %318 = math.tanh %317 : vector<2x128xf32>
    %cst_93 = arith.constant 5.000000e-01 : f32
    %319 = vector.broadcast %cst_93 : f32 to vector<2x128xf32>
    %320 = arith.mulf %319, %318 : vector<2x128xf32>
    %cst_94 = arith.constant 5.000000e-01 : f32
    %321 = vector.broadcast %cst_94 : f32 to vector<2x128xf32>
    %322 = arith.addf %321, %320 : vector<2x128xf32>
    %323 = vector.extract_strided_slice %314 {offsets = [0, 128], sizes = [2, 128], strides = [1, 1]} : vector<2x512xf32> to vector<2x128xf32>
    %cst_95 = arith.constant 5.000000e-01 : f32
    %324 = vector.broadcast %cst_95 : f32 to vector<2x128xf32>
    %325 = arith.mulf %324, %323 : vector<2x128xf32>
    %326 = math.tanh %325 : vector<2x128xf32>
    %cst_96 = arith.constant 5.000000e-01 : f32
    %327 = vector.broadcast %cst_96 : f32 to vector<2x128xf32>
    %328 = arith.mulf %327, %326 : vector<2x128xf32>
    %cst_97 = arith.constant 5.000000e-01 : f32
    %329 = vector.broadcast %cst_97 : f32 to vector<2x128xf32>
    %330 = arith.addf %329, %328 : vector<2x128xf32>
    %331 = vector.extract_strided_slice %314 {offsets = [0, 256], sizes = [2, 128], strides = [1, 1]} : vector<2x512xf32> to vector<2x128xf32>
    %332 = math.tanh %331 : vector<2x128xf32>
    %333 = vector.extract_strided_slice %314 {offsets = [0, 384], sizes = [2, 128], strides = [1, 1]} : vector<2x512xf32> to vector<2x128xf32>
    %cst_98 = arith.constant 5.000000e-01 : f32
    %334 = vector.broadcast %cst_98 : f32 to vector<2x128xf32>
    %335 = arith.mulf %334, %333 : vector<2x128xf32>
    %336 = math.tanh %335 : vector<2x128xf32>
    %cst_99 = arith.constant 5.000000e-01 : f32
    %337 = vector.broadcast %cst_99 : f32 to vector<2x128xf32>
    %338 = arith.mulf %337, %336 : vector<2x128xf32>
    %cst_100 = arith.constant 5.000000e-01 : f32
    %339 = vector.broadcast %cst_100 : f32 to vector<2x128xf32>
    %340 = arith.addf %339, %338 : vector<2x128xf32>
    %341 = arith.mulf %330, %305 : vector<2x128xf32>
    %342 = arith.mulf %322, %332 : vector<2x128xf32>
    %343 = arith.addf %341, %342 : vector<2x128xf32>
    %344 = math.tanh %343 : vector<2x128xf32>
    %345 = arith.mulf %340, %344 : vector<2x128xf32>
    %346 = vector.extract_strided_slice %345 {offsets = [0, 0], sizes = [1, 128], strides = [1, 1]} : vector<2x128xf32> to vector<1x128xf32>
    %347 = vector.extract_strided_slice %345 {offsets = [1, 0], sizes = [1, 128], strides = [1, 1]} : vector<2x128xf32> to vector<1x128xf32>
    %348 = tpu.concatenate %80, %118, %156, %194, %232, %270, %308, %346, %81, %119, %157, %195, %233, %271, %309, %347 in 0 : vector<1x128xf32>, vector<1x128xf32>, vector<1x128xf32>, vector<1x128xf32>, vector<1x128xf32>, vector<1x128xf32>, vector<1x128xf32>, vector<1x128xf32>, vector<1x128xf32>, vector<1x128xf32>, vector<1x128xf32>, vector<1x128xf32>, vector<1x128xf32>, vector<1x128xf32>, vector<1x128xf32>, vector<1x128xf32> -> vector<16x128xf32>
    %c0_101 = arith.constant 0 : index
    %c0_102 = arith.constant 0 : index
    %349 = vector.load %arg8[%c0_101, %c0_102] : memref<1x128xf32, #tpu.memory_space<vmem>>, vector<1x128xf32>
    %350 = vector.shape_cast %349 : vector<1x128xf32> to vector<128xf32>
    %c0_103 = arith.constant 0 : index
    %c0_104 = arith.constant 0 : index
    %351 = vector.load %arg9[%c0_103, %c0_104] : memref<1x128xf32, #tpu.memory_space<vmem>>, vector<1x128xf32>
    %352 = vector.shape_cast %351 : vector<1x128xf32> to vector<128xf32>
    %cst_105 = arith.constant dense<0.000000e+00> : vector<16xf32>
    %353 = vector.multi_reduction <add>, %348, %cst_105 [1] : vector<16x128xf32> to vector<16xf32>
    %354 = vector.shape_cast %353 : vector<16xf32> to vector<16x1xf32>
    %cst_106 = arith.constant 1.280000e+02 : f32
    %355 = vector.broadcast %cst_106 : f32 to vector<16x1xf32>
    %356 = arith.divf %354, %355 : vector<16x1xf32>
    %357 = vector.broadcast %356 : vector<16x1xf32> to vector<16x128xf32>
    %358 = arith.subf %348, %357 : vector<16x128xf32>
    %359 = arith.mulf %358, %358 : vector<16x128xf32>
    %cst_107 = arith.constant dense<0.000000e+00> : vector<16xf32>
    %360 = vector.multi_reduction <add>, %359, %cst_107 [1] : vector<16x128xf32> to vector<16xf32>
    %361 = vector.shape_cast %360 : vector<16xf32> to vector<16x1xf32>
    %cst_108 = arith.constant 1.280000e+02 : f32
    %362 = vector.broadcast %cst_108 : f32 to vector<16x1xf32>
    %363 = arith.divf %361, %362 : vector<16x1xf32>
    %cst_109 = arith.constant 9.99999974E-6 : f32
    %364 = vector.broadcast %cst_109 : f32 to vector<16x1xf32>
    %365 = arith.addf %363, %364 : vector<16x1xf32>
    %366 = math.rsqrt %365 : vector<16x1xf32>
    %367 = vector.broadcast %366 : vector<16x1xf32> to vector<16x128xf32>
    %368 = arith.mulf %358, %367 : vector<16x128xf32>
    %369 = vector.shape_cast %350 : vector<128xf32> to vector<1x128xf32>
    %370 = vector.broadcast %369 : vector<1x128xf32> to vector<16x128xf32>
    %371 = arith.mulf %368, %370 : vector<16x128xf32>
    %372 = vector.shape_cast %352 : vector<128xf32> to vector<1x128xf32>
    %373 = vector.broadcast %372 : vector<1x128xf32> to vector<16x128xf32>
    %374 = arith.addf %371, %373 : vector<16x128xf32>
    %c0_110 = arith.constant 0 : index
    %c0_111 = arith.constant 0 : index
    %375 = vector.load %arg10[%c0_110, %c0_111] : memref<128x128xf32, #tpu.memory_space<vmem>>, vector<128x128xf32>
    %cst_112 = arith.constant dense<0.000000e+00> : vector<16x128xf32>
    %376 = tpu.matmul %374, %375, %cst_112 {dimension_numbers = #tpu.dot_dimension_numbers<[1], [0], [0], [1], [0, 0, 1, 1], [], []>} : vector<16x128xf32>, vector<128x128xf32>, vector<16x128xf32> -> vector<16x128xf32>
    %c0_113 = arith.constant 0 : index
    %c0_114 = arith.constant 0 : index
    %377 = vector.load %arg11[%c0_113, %c0_114] : memref<1x128xf32, #tpu.memory_space<vmem>>, vector<1x128xf32>
    %378 = vector.shape_cast %377 : vector<1x128xf32> to vector<128xf32>
    %379 = vector.shape_cast %378 : vector<128xf32> to vector<1x128xf32>
    %380 = vector.broadcast %379 : vector<1x128xf32> to vector<16x128xf32>
    %381 = arith.addf %376, %380 : vector<16x128xf32>
    %c0_115 = arith.constant 0 : index
    %c0_116 = arith.constant 0 : index
    %382 = vector.load %arg12[%c0_115, %c0_116] : memref<16x128xf32, #tpu.memory_space<vmem>>, vector<16x128xf32>
    tpu.vector_store %arg12[%c0_115, %c0_116], %381 {strides = array<i32>} : memref<16x128xf32, #tpu.memory_space<vmem>>, vector<16x128xf32>,
    return
  }
  func.func @transform_0(%arg0: i32) -> (i32, i32) {
    %c0_i32 = arith.constant 0 : i32
    %c0_i32_0 = arith.constant 0 : i32
    %c0_i32_1 = arith.constant 0 : i32
    return %c0_i32, %c0_i32_0 : i32, i32
  }
  func.func @transform_1(%arg0: i32) -> (i32, i32) {
    %c0_i32 = arith.constant 0 : i32
    %c0_i32_0 = arith.constant 0 : i32
    %c0_i32_1 = arith.constant 0 : i32
    return %c0_i32, %c0_i32_0 : i32, i32
  }
  func.func @transform_2(%arg0: i32) -> (i32, i32) {
    %c0_i32 = arith.constant 0 : i32
    %c0_i32_0 = arith.constant 0 : i32
    %c0_i32_1 = arith.constant 0 : i32
    return %c0_i32, %c0_i32_0 : i32, i32
  }
  func.func @transform_3(%arg0: i32) -> (i32, i32) {
    %c0_i32 = arith.constant 0 : i32
    %c0_i32_0 = arith.constant 0 : i32
    %c0_i32_1 = arith.constant 0 : i32
    return %c0_i32, %c0_i32_0 : i32, i32
  }
  func.func @transform_4(%arg0: i32) -> (i32, i32) {
    %c0_i32 = arith.constant 0 : i32
    %c0_i32_0 = arith.constant 0 : i32
    %c0_i32_1 = arith.constant 0 : i32
    return %c0_i32, %c0_i32_0 : i32, i32
  }
  func.func @transform_5(%arg0: i32) -> (i32, i32) {
    %c0_i32 = arith.constant 0 : i32
    %c0_i32_0 = arith.constant 0 : i32
    %c0_i32_1 = arith.constant 0 : i32
    return %c0_i32, %c0_i32_0 : i32, i32
  }
  func.func @transform_6(%arg0: i32) -> (i32, i32) {
    %c0_i32 = arith.constant 0 : i32
    %c0_i32_0 = arith.constant 0 : i32
    %c0_i32_1 = arith.constant 0 : i32
    return %c0_i32, %c0_i32_0 : i32, i32
  }
  func.func @transform_7(%arg0: i32) -> (i32, i32) {
    %c0_i32 = arith.constant 0 : i32
    %c0_i32_0 = arith.constant 0 : i32
    %c0_i32_1 = arith.constant 0 : i32
    return %c0_i32, %c0_i32_0 : i32, i32
  }
  func.func @transform_8(%arg0: i32) -> (i32, i32) {
    %c0_i32 = arith.constant 0 : i32
    %c0_i32_0 = arith.constant 0 : i32
    %c0_i32_1 = arith.constant 0 : i32
    return %c0_i32, %c0_i32_0 : i32, i32
  }
  func.func @transform_9(%arg0: i32) -> (i32, i32) {
    %c0_i32 = arith.constant 0 : i32
    %c0_i32_0 = arith.constant 0 : i32
    %c0_i32_1 = arith.constant 0 : i32
    return %c0_i32, %c0_i32_0 : i32, i32
  }
  func.func @transform_10(%arg0: i32) -> (i32, i32) {
    %c0_i32 = arith.constant 0 : i32
    %c0_i32_0 = arith.constant 0 : i32
    %c0_i32_1 = arith.constant 0 : i32
    return %c0_i32, %c0_i32_0 : i32, i32
  }
  func.func @transform_11(%arg0: i32) -> (i32, i32) {
    %c0_i32 = arith.constant 0 : i32
    %c0_i32_0 = arith.constant 0 : i32
    %c0_i32_1 = arith.constant 0 : i32
    return %c0_i32, %c0_i32_0 : i32, i32
  }
}

</mosaic_0001>

<llo_original>
// kernel: rnn_model_forward.1
$region0: #{rnn_model_forward.1}
  #allocation0 [shape = 'u32[]', space=smem, size = 0x4, offset = 0x4, fixed_abs, tag = 'smem constant byte address 0x4 - core index']
  #allocation1 [shape = 'u32[144,128]{1,0:T(1,128)}', space=vmem, size = 0x12000, scoped, tag = 'internal scratch']
  %s0 = inlined_call_operand.vmem [shape: s32[16,1], index: 0, kind: input, shape index: {}]
  %s1 = inlined_call_operand.hbm [shape: f32[128,128], index: 1, kind: input, shape index: {}]
  %s2 = inlined_call_operand.vmem [shape: f32[1,128], index: 2, kind: input, shape index: {}]
  %s3 = inlined_call_operand.vmem [shape: f32[1,128], index: 3, kind: input, shape index: {}]
  %s4 = inlined_call_operand.hbm [shape: f32[128,512], index: 4, kind: input, shape index: {}]
  %s5 = inlined_call_operand.hbm [shape: f32[128,512], index: 5, kind: input, shape index: {}]
  %s6 = inlined_call_operand.vmem [shape: f32[1,512], index: 6, kind: input, shape index: {}]
  %s7 = inlined_call_operand.vmem [shape: f32[1,128], index: 7, kind: input, shape index: {}]
  %s8 = inlined_call_operand.vmem [shape: f32[1,128], index: 8, kind: input, shape index: {}]
  %s9 = inlined_call_operand.hbm [shape: f32[128,128], index: 9, kind: input, shape index: {}]
  %s10 = inlined_call_operand.vmem [shape: f32[1,128], index: 10, kind: input, shape index: {}]
  %s11 = inlined_call_operand.hbm [shape: f32[16,128], index: 11, kind: output, shape index: {}]
  %s12 = sld [smem:[#allocation0]]
  $region70: #{rnn_model_forward.1} parent=0
    _
  %s14 = ssub.s32 1, %s12
  %s15 = scalar_select 0, %s14, %s12
  $region1: #{rnn_model_forward.1} parent=0
    #allocation2 [shape = 'u8[65536]{0}', space=vmem, size = 0x10000, scoped, tag = 'input window, operand 1, single buffered']
    #allocation3 [shape = 's32[1]{0}', space=sflag, size = 0x4, scoped, tag = 'scoped memory for rnn_model_forward.1']
    #allocation4 [shape = 's32[1]{0}', space=sflag, size = 0x4, scoped, tag = 'scoped memory for rnn_model_forward.1']
    #allocation5 [shape = 'u8[262144]{0}', space=vmem, size = 0x40000, scoped, tag = 'input window, operand 4, single buffered']
    #allocation6 [shape = 's32[1]{0}', space=sflag, size = 0x4, scoped, tag = 'scoped memory for rnn_model_forward.1']
    #allocation7 [shape = 'u8[262144]{0}', space=vmem, size = 0x40000, scoped, tag = 'input window, operand 5, single buffered']
    #allocation8 [shape = 'u8[65536]{0}', space=vmem, size = 0x10000, scoped, tag = 'input window, operand 9, single buffered']
    #allocation9 [shape = 's32[1]{0}', space=sflag, size = 0x4, scoped, tag = 'scoped memory for rnn_model_forward.1']
    #allocation10 [shape = 'u8[8192]{0}', space=vmem, size = 0x2000, scoped, tag = 'output window, operand 0, single buffered']
    %16 = vsyncpa [#allocation3], 0
    %17 = vsyncpa [#allocation6], 0
    %18 = vsyncpa [#allocation9], 0
    %19 = vsyncpa [#allocation4], 0
    // Predicated region
    $region2: #{rnn_model_forward.1} parent=1 // pred_check
      _
    $region3: #{rnn_model_forward.1} parent=1 // pred_check_branch
      %21 = sbr.rel (0) target = $region5
    $region4: #{rnn_model_forward.1} parent=1 // pred_region
      _
    $region5: #{rnn_model_forward.1} parent=1 // pred_fallthru
      _
    // Predicated region
    $region6: #{rnn_model_forward.1} parent=1 // pred_check
      _
    $region7: #{rnn_model_forward.1} parent=1 // pred_check_branch
      %23 = sbr.rel (0) target = $region9
    $region8: #{rnn_model_forward.1} parent=1 // pred_region
      %s25 = ssub.s32 2048, 2048
      %26 = vsyncadd [#allocation3], %s25
      %s27 = sshll.u32 [#allocation2], 4
      %s28 = int_to_ptr.vmem [resolvable:$true] %s27
      %33 = dma.hbm_to_vmem [thread:$0]  %s1, 2048, %s28, [#allocation3], 128, 128, 8
    $region9: #{rnn_model_forward.1} parent=1 // pred_fallthru
      _
    // Predicated region
    $region10: #{rnn_model_forward.1} parent=1 // pred_check
      _
    $region11: #{rnn_model_forward.1} parent=1 // pred_check_branch
      %35 = sbr.rel (0) target = $region13
    $region12: #{rnn_model_forward.1} parent=1 // pred_region
      _
    $region13: #{rnn_model_forward.1} parent=1 // pred_fallthru
      _
    // Predicated region
    $region14: #{rnn_model_forward.1} parent=1 // pred_check
      _
    $region15: #{rnn_model_forward.1} parent=1 // pred_check_branch
      %37 = sbr.rel (0) target = $region17
    $region16: #{rnn_model_forward.1} parent=1 // pred_region
      _
    $region17: #{rnn_model_forward.1} parent=1 // pred_fallthru
      _
    // Predicated region
    $region18: #{rnn_model_forward.1} parent=1 // pred_check
      _
    $region19: #{rnn_model_forward.1} parent=1 // pred_check_branch
      %39 = sbr.rel (0) target = $region21
    $region20: #{rnn_model_forward.1} parent=1 // pred_region
      %s41 = ssub.s32 8192, 8192
      %42 = vsyncadd [#allocation6], %s41
      %s43 = sshll.u32 [#allocation5], 4
      %s44 = int_to_ptr.vmem [resolvable:$true] %s43
      %49 = dma.hbm_to_vmem [thread:$0]  %s4, 8192, %s44, [#allocation6], 512, 512, 32
    $region21: #{rnn_model_forward.1} parent=1 // pred_fallthru
      _
    // Predicated region
    $region22: #{rnn_model_forward.1} parent=1 // pred_check
      _
    $region23: #{rnn_model_forward.1} parent=1 // pred_check_branch
      %51 = sbr.rel (0) target = $region25
    $region24: #{rnn_model_forward.1} parent=1 // pred_region
      %s53 = ssub.s32 8192, 8192
      %54 = vsyncadd [#allocation6], %s53
      %s55 = sshll.u32 [#allocation7], 4
      %s56 = int_to_ptr.vmem [resolvable:$true] %s55
      %61 = dma.hbm_to_vmem [thread:$0]  %s5, 8192, %s56, [#allocation6], 512, 512, 32
    $region25: #{rnn_model_forward.1} parent=1 // pred_fallthru
      _
    // Predicated region
    $region26: #{rnn_model_forward.1} parent=1 // pred_check
      _
    $region27: #{rnn_model_forward.1} parent=1 // pred_check_branch
      %63 = sbr.rel (0) target = $region29
    $region28: #{rnn_model_forward.1} parent=1 // pred_region
      _
    $region29: #{rnn_model_forward.1} parent=1 // pred_fallthru
      _
    // Predicated region
    $region30: #{rnn_model_forward.1} parent=1 // pred_check
      _
    $region31: #{rnn_model_forward.1} parent=1 // pred_check_branch
      %65 = sbr.rel (0) target = $region33
    $region32: #{rnn_model_forward.1} parent=1 // pred_region
      _
    $region33: #{rnn_model_forward.1} parent=1 // pred_fallthru
      _
    // Predicated region
    $region34: #{rnn_model_forward.1} parent=1 // pred_check
      _
    $region35: #{rnn_model_forward.1} parent=1 // pred_check_branch
      %67 = sbr.rel (0) target = $region37
    $region36: #{rnn_model_forward.1} parent=1 // pred_region
      _
    $region37: #{rnn_model_forward.1} parent=1 // pred_fallthru
      _
    // Predicated region
    $region38: #{rnn_model_forward.1} parent=1 // pred_check
      _
    $region39: #{rnn_model_forward.1} parent=1 // pred_check_branch
      %69 = sbr.rel (0) target = $region41
    $region40: #{rnn_model_forward.1} parent=1 // pred_region
      %s71 = ssub.s32 2048, 2048
      %72 = vsyncadd [#allocation9], %s71
      %s73 = sshll.u32 [#allocation8], 4
      %s74 = int_to_ptr.vmem [resolvable:$true] %s73
      %79 = dma.hbm_to_vmem [thread:$0]  %s9, 2048, %s74, [#allocation9], 128, 128, 8
    $region41: #{rnn_model_forward.1} parent=1 // pred_fallthru
      _
    // Predicated region
    $region42: #{rnn_model_forward.1} parent=1 // pred_check
      _
    $region43: #{rnn_model_forward.1} parent=1 // pred_check_branch
      %81 = sbr.rel (0) target = $region45
    $region44: #{rnn_model_forward.1} parent=1 // pred_region
      _
    $region45: #{rnn_model_forward.1} parent=1 // pred_fallthru
      _
    // Predicated region
    $region46: #{rnn_model_forward.1} parent=1 // pred_check
      _
    $region47: #{rnn_model_forward.1} parent=1 // pred_check_branch
      %83 = sbr.rel (0) target = $region49
    $region48: #{rnn_model_forward.1} parent=1 // pred_region
      %84 = dma.done [#allocation3], 2048
    $region49: #{rnn_model_forward.1} parent=1 // pred_fallthru
      _
    // Predicated region
    $region50: #{rnn_model_forward.1} parent=1 // pred_check
      _
    $region51: #{rnn_model_forward.1} parent=1 // pred_check_branch
      %86 = sbr.rel (0) target = $region53
    $region52: #{rnn_model_forward.1} parent=1 // pred_region
      %87 = dma.done [#allocation6], 8192
    $region53: #{rnn_model_forward.1} parent=1 // pred_fallthru
      _
    // Predicated region
    $region54: #{rnn_model_forward.1} parent=1 // pred_check
      _
    $region55: #{rnn_model_forward.1} parent=1 // pred_check_branch
      %89 = sbr.rel (0) target = $region57
    $region56: #{rnn_model_forward.1} parent=1 // pred_region
      %90 = dma.done [#allocation6], 8192
    $region57: #{rnn_model_forward.1} parent=1 // pred_fallthru
      _
    // Predicated region
    $region58: #{rnn_model_forward.1} parent=1 // pred_check
      _
    $region59: #{rnn_model_forward.1} parent=1 // pred_check_branch
      %92 = sbr.rel (0) target = $region61
    $region60: #{rnn_model_forward.1} parent=1 // pred_region
      %93 = dma.done [#allocation9], 2048
    $region61: #{rnn_model_forward.1} parent=1 // pred_fallthru
      _
    %v94 = vld [vmem:[%s0] sm:$0xff]
    %v95 = vld [vmem:[%s0 + $0x8] sm:$0xff]
    %v96 = vlaneseq
    %v97 = vand.u32 %v96, 127
    %98 = vset.pattern.permute.xlu0 0
    %99 = vperm.xlu0 %98, %v94
    %v100 = vpop.permute.xlu0 %99
    %101 = vset.pattern.permute.xlu0 0
    %102 = vperm.xlu0 %101, %v95
    %v103 = vpop.permute.xlu0 %102
    %vm104 = vcmp.eq.s32.totalorder %v97, %v100
    %vm105 = vcmp.eq.s32.totalorder %v97, %v103
    %v106 = vsel %vm104, 1, 0
    %v107 = vsel %vm105, 1, 0
    %v108 = vcvt.s32.f32 %v106
    %v109 = vcvt.s32.f32 %v107
    %v110 = vld [vmem:[#allocation2] sm:$0xff]
    %v111 = vld [vmem:[#allocation2 + $0x8] sm:$0xff]
    %v112 = vld [vmem:[#allocation2 + $0x10] sm:$0xff]
    %v113 = vld [vmem:[#allocation2 + $0x18] sm:$0xff]
    %v114 = vld [vmem:[#allocation2 + $0x20] sm:$0xff]
    %v115 = vld [vmem:[#allocation2 + $0x28] sm:$0xff]
    %v116 = vld [vmem:[#allocation2 + $0x30] sm:$0xff]
    %v117 = vld [vmem:[#allocation2 + $0x38] sm:$0xff]
    %v118 = vld [vmem:[#allocation2 + $0x40] sm:$0xff]
    %v119 = vld [vmem:[#allocation2 + $0x48] sm:$0xff]
    %v120 = vld [vmem:[#allocation2 + $0x50] sm:$0xff]
    %v121 = vld [vmem:[#allocation2 + $0x58] sm:$0xff]
    %v122 = vld [vmem:[#allocation2 + $0x60] sm:$0xff]
    %v123 = vld [vmem:[#allocation2 + $0x68] sm:$0xff]
    %v124 = vld [vmem:[#allocation2 + $0x70] sm:$0xff]
    %v125 = vld [vmem:[#allocation2 + $0x78] sm:$0xff]
    %126 = vmatprep.subr.mxu0 0.0
    %127 = vmatpush1.msra.mxu0 %v110
    %128 = vmatprep.subr.mxu0 0.0
    %129 = vmatpush1.msra.mxu0 %v111
    %130 = vmatprep.subr.mxu0 0.0
    %131 = vmatpush1.msra.mxu0 %v112
    %132 = vmatprep.subr.mxu0 0.0
    %133 = vmatpush1.msra.mxu0 %v113
    %134 = vmatprep.subr.mxu0 0.0
    %135 = vmatpush1.msra.mxu0 %v114
    %136 = vmatprep.subr.mxu0 0.0
    %137 = vmatpush1.msra.mxu0 %v115
    %138 = vmatprep.subr.mxu0 0.0
    %139 = vmatpush1.msra.mxu0 %v116
    %140 = vmatprep.subr.mxu0 0.0
    %141 = vmatpush1.msra.mxu0 %v117
    %142 = vmatprep.subr.mxu0 0.0
    %143 = vmatpush1.msra.mxu0 %v118
    %144 = vmatprep.subr.mxu0 0.0
    %145 = vmatpush1.msra.mxu0 %v119
    %146 = vmatprep.subr.mxu0 0.0
    %147 = vmatpush1.msra.mxu0 %v120
    %148 = vmatprep.subr.mxu0 0.0
    %149 = vmatpush1.msra.mxu0 %v121
    %150 = vmatprep.subr.mxu0 0.0
    %151 = vmatpush1.msra.mxu0 %v122
    %152 = vmatprep.subr.mxu0 0.0
    %153 = vmatpush1.msra.mxu0 %v123
    %154 = vmatprep.subr.mxu0 0.0
    %155 = vmatpush1.msra.mxu0 %v124
    %156 = vmatprep.subr.mxu0 0.0
    %157 = vmatpush1.msra.mxu0 %v125
    %158 = vmatprep.subr.mxu0 0.0
    %159 = vmatpush1.msra.mxu0 0.0
    %160 = vmatprep.subr.mxu0 0.0
    %161 = vmatpush1.msra.mxu0 0.0
    %162 = vmatprep.subr.mxu0 0.0
    %163 = vmatpush1.msra.mxu0 0.0
    %164 = vmatprep.subr.mxu0 0.0
    %165 = vmatpush1.msra.mxu0 0.0
    %166 = vmatprep.subr.mxu0 0.0
    %167 = vmatpush1.msra.mxu0 0.0
    %168 = vmatprep.subr.mxu0 0.0
    %169 = vmatpush1.msra.mxu0 0.0
    %170 = vmatprep.subr.mxu0 0.0
    %171 = vmatpush1.msra.mxu0 0.0
    %172 = vmatprep.subr.mxu0 0.0
    %173 = vmatpush1.msra.mxu0 0.0
    %174 = vmatprep.subr.mxu0 0.0
    %175 = vmatpush1.msra.mxu0 0.0
    %176 = vmatprep.subr.mxu0 0.0
    %177 = vmatpush1.msra.mxu0 0.0
    %178 = vmatprep.subr.mxu0 0.0
    %179 = vmatpush1.msra.mxu0 0.0
    %180 = vmatprep.subr.mxu0 0.0
    %181 = vmatpush1.msra.mxu0 0.0
    %182 = vmatprep.subr.mxu0 0.0
    %183 = vmatpush1.msra.mxu0 0.0
    %184 = vmatprep.subr.mxu0 0.0
    %185 = vmatpush1.msra.mxu0 0.0
    %186 = vmatprep.subr.mxu0 0.0
    %187 = vmatpush1.msra.mxu0 0.0
    %188 = vmatprep.subr.mxu0 0.0
    %189 = vmatpush1.msra.mxu0 0.0
    %190 = vmatprep.mubr.f32.mxu0 0.0
    %191 = vmatmul.mubr.f32.gmra.mrb[0].mxu0 %v108
    %v192 = vpop.f32.mrb[0].mxu0
    %v193 = vadd.f32 0.0, %v192
    %v194 = vpop.f32.mrb[0].mxu0
    %195 = vmatprep.mubr.f32.mxu0 0.0
    %196 = vmatmul.mubr.f32.gmra.mrb[0].mxu0 %v109
    %v197 = vpop.f32.mrb[0].mxu0
    %v198 = vadd.f32 0.0, %v197
    %v199 = vpop.f32.mrb[0].mxu0
    %200 = vdwg.mxu0
    %v201 = vld [vmem:[%s2] sm:$0x1]
    %v202 = vld [vmem:[%s3] sm:$0x1]
    %203 = vadd.xlane.f32.xlu0 %v193
    %v204 = vpop.xlane.xlu0 %203
    %205 = vadd.xlane.f32.xlu0 %v198
    %v206 = vpop.xlane.xlu0 %205
    %v207 = vrcp.pop 128.0
    %v208 = vmul.f32 %v204, %v207
    %v209 = vmul.f32 %v206, %v207
    %v210 = vsub.f32 %v193, %v208
    %v211 = vsub.f32 %v198, %v209
    %v212 = vmul.f32 %v210, %v210
    %v213 = vmul.f32 %v211, %v211
    %214 = vadd.xlane.f32.xlu0 %v212
    %v215 = vpop.xlane.xlu0 %214
    %216 = vadd.xlane.f32.xlu0 %v213
    %v217 = vpop.xlane.xlu0 %216
    %v218 = vmul.f32 %v215, %v207
    %v219 = vmul.f32 %v217, %v207
    %v220 = vadd.f32 %v218, 1e-05
    %v221 = vadd.f32 %v219, 1e-05
    %v222 = vrsqrt.pop %v220
    %v223 = vrsqrt.pop %v221
    %v224 = vmul.f32 %v210, %v222
    %v225 = vmul.f32 %v211, %v223
    %v227 = vlaneseq
    %v228 = vshrl.u32 %v227, 7
    %v229 = vsub.s32 0, %v228
    %v230 = vrot.slane %v201, %v229
    %v232 = vmul.f32 %v224, %v230
    %v233 = vmul.f32 %v225, %v230
    %v235 = vlaneseq
    %v236 = vshrl.u32 %v235, 7
    %v237 = vsub.s32 0, %v236
    %v238 = vrot.slane %v202, %v237
    %v240 = vadd.f32 %v232, %v238
    %v241 = vadd.f32 %v233, %v238
    %v242 = vld [vmem:[#allocation5] sm:$0xff]
    %v243 = vld [vmem:[#allocation5 + $0x8] sm:$0xff]
    %v244 = vld [vmem:[#allocation5 + $0x10] sm:$0xff]
    %v245 = vld [vmem:[#allocation5 + $0x18] sm:$0xff]
    %v246 = vld [vmem:[#allocation5 + $0x20] sm:$0xff]
    %v247 = vld [vmem:[#allocation5 + $0x28] sm:$0xff]
    %v248 = vld [vmem:[#allocation5 + $0x30] sm:$0xff]
    %v249 = vld [vmem:[#allocation5 + $0x38] sm:$0xff]
    %v250 = vld [vmem:[#allocation5 + $0x40] sm:$0xff]
    %v251 = vld [vmem:[#allocation5 + $0x48] sm:$0xff]
    %v252 = vld [vmem:[#allocation5 + $0x50] sm:$0xff]
    %v253 = vld [vmem:[#allocation5 + $0x58] sm:$0xff]
    %v254 = vld [vmem:[#allocation5 + $0x60] sm:$0xff]
    %v255 = vld [vmem:[#allocation5 + $0x68] sm:$0xff]
    %v256 = vld [vmem:[#allocation5 + $0x70] sm:$0xff]
    %v257 = vld [vmem:[#allocation5 + $0x78] sm:$0xff]
    %v258 = vld [vmem:[#allocation5 + $0x80] sm:$0xff]
    %v259 = vld [vmem:[#allocation5 + $0x88] sm:$0xff]
    %v260 = vld [vmem:[#allocation5 + $0x90] sm:$0xff]
    %v261 = vld [vmem:[#allocation5 + $0x98] sm:$0xff]
    %v262 = vld [vmem:[#allocation5 + $0xa0] sm:$0xff]
    %v263 = vld [vmem:[#allocation5 + $0xa8] sm:$0xff]
    %v264 = vld [vmem:[#allocation5 + $0xb0] sm:$0xff]
    %v265 = vld [vmem:[#allocation5 + $0xb8] sm:$0xff]
    %v266 = vld [vmem:[#allocation5 + $0xc0] sm:$0xff]
    %v267 = vld [vmem:[#allocation5 + $0xc8] sm:$0xff]
    %v268 = vld [vmem:[#allocation5 + $0xd0] sm:$0xff]
    %v269 = vld [vmem:[#allocation5 + $0xd8] sm:$0xff]
    %v270 = vld [vmem:[#allocation5 + $0xe0] sm:$0xff]
    %v271 = vld [vmem:[#allocation5 + $0xe8] sm:$0xff]
    %v272 = vld [vmem:[#allocation5 + $0xf0] sm:$0xff]
    %v273 = vld [vmem:[#allocation5 + $0xf8] sm:$0xff]
    %v274 = vld [vmem:[#allocation5 + $0x100] sm:$0xff]
    %v275 = vld [vmem:[#allocation5 + $0x108] sm:$0xff]
    %v276 = vld [vmem:[#allocation5 + $0x110] sm:$0xff]
    %v277 = vld [vmem:[#allocation5 + $0x118] sm:$0xff]
    %v278 = vld [vmem:[#allocation5 + $0x120] sm:$0xff]
    %v279 = vld [vmem:[#allocation5 + $0x128] sm:$0xff]
    %v280 = vld [vmem:[#allocation5 + $0x130] sm:$0xff]
    %v281 = vld [vmem:[#allocation5 + $0x138] sm:$0xff]
    %v282 = vld [vmem:[#allocation5 + $0x140] sm:$0xff]
    %v283 = vld [vmem:[#allocation5 + $0x148] sm:$0xff]
    %v284 = vld [vmem:[#allocation5 + $0x150] sm:$0xff]
    %v285 = vld [vmem:[#allocation5 + $0x158] sm:$0xff]
    %v286 = vld [vmem:[#allocation5 + $0x160] sm:$0xff]
    %v287 = vld [vmem:[#allocation5 + $0x168] sm:$0xff]
    %v288 = vld [vmem:[#allocation5 + $0x170] sm:$0xff]
    %v289 = vld [vmem:[#allocation5 + $0x178] sm:$0xff]
    %v290 = vld [vmem:[#allocation5 + $0x180] sm:$0xff]
    %v291 = vld [vmem:[#allocation5 + $0x188] sm:$0xff]
    %v292 = vld [vmem:[#allocation5 + $0x190] sm:$0xff]
    %v293 = vld [vmem:[#allocation5 + $0x198] sm:$0xff]
    %v294 = vld [vmem:[#allocation5 + $0x1a0] sm:$0xff]
    %v295 = vld [vmem:[#allocation5 + $0x1a8] sm:$0xff]
    %v296 = vld [vmem:[#allocation5 + $0x1b0] sm:$0xff]
    %v297 = vld [vmem:[#allocation5 + $0x1b8] sm:$0xff]
    %v298 = vld [vmem:[#allocation5 + $0x1c0] sm:$0xff]
    %v299 = vld [vmem:[#allocation5 + $0x1c8] sm:$0xff]
    %v300 = vld [vmem:[#allocation5 + $0x1d0] sm:$0xff]
    %v301 = vld [vmem:[#allocation5 + $0x1d8] sm:$0xff]
    %v302 = vld [vmem:[#allocation5 + $0x1e0] sm:$0xff]
    %v303 = vld [vmem:[#allocation5 + $0x1e8] sm:$0xff]
    %v304 = vld [vmem:[#allocation5 + $0x1f0] sm:$0xff]
    %v305 = vld [vmem:[#allocation5 + $0x1f8] sm:$0xff]
    %v306 = vld [vmem:[%s6] sm:$0xf]
    %v308 = vlaneseq
    %v309 = vshrl.u32 %v308, 7
    %v310 = vsub.s32 0, %v309
    %v311 = vrot.slane %v306, %v310
    %v312 = vlaneseq
    %v313 = vshrl.u32 %v312, 7
    %v314 = vsub.s32 1, %v313
    %v315 = vrot.slane %v306, %v314
    %v316 = vlaneseq
    %v317 = vshrl.u32 %v316, 7
    %v318 = vsub.s32 2, %v317
    %v319 = vrot.slane %v306, %v318
    %v320 = vlaneseq
    %v321 = vshrl.u32 %v320, 7
    %v322 = vsub.s32 3, %v321
    %v323 = vrot.slane %v306, %v322
    %328 = vmatprep.subr.mxu0 %v243
    %329 = vmatpush1.msra.mxu0 %v242
    %330 = vmatprep.subr.mxu0 %v247
    %331 = vmatpush1.msra.mxu0 %v246
    %332 = vmatprep.subr.mxu0 %v251
    %333 = vmatpush1.msra.mxu0 %v250
    %334 = vmatprep.subr.mxu0 %v255
    %335 = vmatpush1.msra.mxu0 %v254
    %336 = vmatprep.subr.mxu0 %v259
    %337 = vmatpush1.msra.mxu0 %v258
    %338 = vmatprep.subr.mxu0 %v263
    %339 = vmatpush1.msra.mxu0 %v262
    %340 = vmatprep.subr.mxu0 %v267
    %341 = vmatpush1.msra.mxu0 %v266
    %342 = vmatprep.subr.mxu0 %v271
    %343 = vmatpush1.msra.mxu0 %v270
    %344 = vmatprep.subr.mxu0 %v275
    %345 = vmatpush1.msra.mxu0 %v274
    %346 = vmatprep.subr.mxu0 %v279
    %347 = vmatpush1.msra.mxu0 %v278
    %348 = vmatprep.subr.mxu0 %v283
    %349 = vmatpush1.msra.mxu0 %v282
    %350 = vmatprep.subr.mxu0 %v287
    %351 = vmatpush1.msra.mxu0 %v286
    %352 = vmatprep.subr.mxu0 %v291
    %353 = vmatpush1.msra.mxu0 %v290
    %354 = vmatprep.subr.mxu0 %v295
    %355 = vmatpush1.msra.mxu0 %v294
    %356 = vmatprep.subr.mxu0 %v299
    %357 = vmatpush1.msra.mxu0 %v298
    %358 = vmatprep.subr.mxu0 %v303
    %359 = vmatpush1.msra.mxu0 %v302
    %360 = vmatprep.subr.mxu0 0.0
    %361 = vmatpush1.msra.mxu0 0.0
    %362 = vmatprep.subr.mxu0 0.0
    %363 = vmatpush1.msra.mxu0 0.0
    %364 = vmatprep.subr.mxu0 0.0
    %365 = vmatpush1.msra.mxu0 0.0
    %366 = vmatprep.subr.mxu0 0.0
    %367 = vmatpush1.msra.mxu0 0.0
    %368 = vmatprep.subr.mxu0 0.0
    %369 = vmatpush1.msra.mxu0 0.0
    %370 = vmatprep.subr.mxu0 0.0
    %371 = vmatpush1.msra.mxu0 0.0
    %372 = vmatprep.subr.mxu0 0.0
    %373 = vmatpush1.msra.mxu0 0.0
    %374 = vmatprep.subr.mxu0 0.0
    %375 = vmatpush1.msra.mxu0 0.0
    %376 = vmatprep.subr.mxu0 0.0
    %377 = vmatpush1.msra.mxu0 0.0
    %378 = vmatprep.subr.mxu0 0.0
    %379 = vmatpush1.msra.mxu0 0.0
    %380 = vmatprep.subr.mxu0 0.0
    %381 = vmatpush1.msra.mxu0 0.0
    %382 = vmatprep.subr.mxu0 0.0
    %383 = vmatpush1.msra.mxu0 0.0
    %384 = vmatprep.subr.mxu0 0.0
    %385 = vmatpush1.msra.mxu0 0.0
    %386 = vmatprep.subr.mxu0 0.0
    %387 = vmatpush1.msra.mxu0 0.0
    %388 = vmatprep.subr.mxu0 0.0
    %389 = vmatpush1.msra.mxu0 0.0
    %390 = vmatprep.subr.mxu0 0.0
    %391 = vmatpush1.msra.mxu0 0.0
    %392 = vmatprep.mubr.f32.mxu0 0.0
    %393 = vmatmul.mubr.f32.gmra.mrb[0].mxu0 %v240
    %v394 = vpop.f32.mrb[0].mxu0
    %v395 = vadd.f32 %v311, %v394
    %v396 = vpop.f32.mrb[0].mxu0
    %v397 = vadd.f32 %v315, %v396
    %398 = vmatprep.mubr.f32.mxu0 0.0
    %399 = vmatmul.mubr.f32.gmra.mrb[0].mxu0 %v241
    %v400 = vpop.f32.mrb[0].mxu0
    %v401 = vadd.f32 %v311, %v400
    %v402 = vpop.f32.mrb[0].mxu0
    %v403 = vadd.f32 %v315, %v402
    %404 = vdwg.mxu0
    %405 = vmatprep.subr.mxu0 %v245
    %406 = vmatpush1.msra.mxu0 %v244
    %407 = vmatprep.subr.mxu0 %v249
    %408 = vmatpush1.msra.mxu0 %v248
    %409 = vmatprep.subr.mxu0 %v253
    %410 = vmatpush1.msra.mxu0 %v252
    %411 = vmatprep.subr.mxu0 %v257
    %412 = vmatpush1.msra.mxu0 %v256
    %413 = vmatprep.subr.mxu0 %v261
    %414 = vmatpush1.msra.mxu0 %v260
    %415 = vmatprep.subr.mxu0 %v265
    %416 = vmatpush1.msra.mxu0 %v264
    %417 = vmatprep.subr.mxu0 %v269
    %418 = vmatpush1.msra.mxu0 %v268
    %419 = vmatprep.subr.mxu0 %v273
    %420 = vmatpush1.msra.mxu0 %v272
    %421 = vmatprep.subr.mxu0 %v277
    %422 = vmatpush1.msra.mxu0 %v276
    %423 = vmatprep.subr.mxu0 %v281
    %424 = vmatpush1.msra.mxu0 %v280
    %425 = vmatprep.subr.mxu0 %v285
    %426 = vmatpush1.msra.mxu0 %v284
    %427 = vmatprep.subr.mxu0 %v289
    %428 = vmatpush1.msra.mxu0 %v288
    %429 = vmatprep.subr.mxu0 %v293
    %430 = vmatpush1.msra.mxu0 %v292
    %431 = vmatprep.subr.mxu0 %v297
    %432 = vmatpush1.msra.mxu0 %v296
    %433 = vmatprep.subr.mxu0 %v301
    %434 = vmatpush1.msra.mxu0 %v300
    %435 = vmatprep.subr.mxu0 %v305
    %436 = vmatpush1.msra.mxu0 %v304
    %437 = vmatprep.subr.mxu0 0.0
    %438 = vmatpush1.msra.mxu0 0.0
    %439 = vmatprep.subr.mxu0 0.0
    %440 = vmatpush1.msra.mxu0 0.0
    %441 = vmatprep.subr.mxu0 0.0
    %442 = vmatpush1.msra.mxu0 0.0
    %443 = vmatprep.subr.mxu0 0.0
    %444 = vmatpush1.msra.mxu0 0.0
    %445 = vmatprep.subr.mxu0 0.0
    %446 = vmatpush1.msra.mxu0 0.0
    %447 = vmatprep.subr.mxu0 0.0
    %448 = vmatpush1.msra.mxu0 0.0
    %449 = vmatprep.subr.mxu0 0.0
    %450 = vmatpush1.msra.mxu0 0.0
    %451 = vmatprep.subr.mxu0 0.0
    %452 = vmatpush1.msra.mxu0 0.0
    %453 = vmatprep.subr.mxu0 0.0
    %454 = vmatpush1.msra.mxu0 0.0
    %455 = vmatprep.subr.mxu0 0.0
    %456 = vmatpush1.msra.mxu0 0.0
    %457 = vmatprep.subr.mxu0 0.0
    %458 = vmatpush1.msra.mxu0 0.0
    %459 = vmatprep.subr.mxu0 0.0
    %460 = vmatpush1.msra.mxu0 0.0
    %461 = vmatprep.subr.mxu0 0.0
    %462 = vmatpush1.msra.mxu0 0.0
    %463 = vmatprep.subr.mxu0 0.0
    %464 = vmatpush1.msra.mxu0 0.0
    %465 = vmatprep.subr.mxu0 0.0
    %466 = vmatpush1.msra.mxu0 0.0
    %467 = vmatprep.subr.mxu0 0.0
    %468 = vmatpush1.msra.mxu0 0.0
    %469 = vmatprep.mubr.f32.mxu0 0.0
    %470 = vmatmul.mubr.f32.gmra.mrb[0].mxu0 %v240
    %v471 = vpop.f32.mrb[0].mxu0
    %v472 = vadd.f32 %v319, %v471
    %v473 = vpop.f32.mrb[0].mxu0
    %v474 = vadd.f32 %v323, %v473
    %475 = vmatprep.mubr.f32.mxu0 0.0
    %476 = vmatmul.mubr.f32.gmra.mrb[0].mxu0 %v241
    %v477 = vpop.f32.mrb[0].mxu0
    %v478 = vadd.f32 %v319, %v477
    %v479 = vpop.f32.mrb[0].mxu0
    %v480 = vadd.f32 %v323, %v479
    %481 = vdwg.mxu0
    %v482 = vld [vmem:[#allocation7] sm:$0xff]
    %v483 = vld [vmem:[#allocation7 + $0x8] sm:$0xff]
    %v484 = vld [vmem:[#allocation7 + $0x10] sm:$0xff]
    %v485 = vld [vmem:[#allocation7 + $0x18] sm:$0xff]
    %v486 = vld [vmem:[#allocation7 + $0x20] sm:$0xff]
    %v487 = vld [vmem:[#allocation7 + $0x28] sm:$0xff]
    %v488 = vld [vmem:[#allocation7 + $0x30] sm:$0xff]
    %v489 = vld [vmem:[#allocation7 + $0x38] sm:$0xff]
    %v490 = vld [vmem:[#allocation7 + $0x40] sm:$0xff]
    %v491 = vld [vmem:[#allocation7 + $0x48] sm:$0xff]
    %v492 = vld [vmem:[#allocation7 + $0x50] sm:$0xff]
    %v493 = vld [vmem:[#allocation7 + $0x58] sm:$0xff]
    %v494 = vld [vmem:[#allocation7 + $0x60] sm:$0xff]
    %v495 = vld [vmem:[#allocation7 + $0x68] sm:$0xff]
    %v496 = vld [vmem:[#allocation7 + $0x70] sm:$0xff]
    %v497 = vld [vmem:[#allocation7 + $0x78] sm:$0xff]
    %v498 = vld [vmem:[#allocation7 + $0x80] sm:$0xff]
    %v499 = vld [vmem:[#allocation7 + $0x88] sm:$0xff]
    %v500 = vld [vmem:[#allocation7 + $0x90] sm:$0xff]
    %v501 = vld [vmem:[#allocation7 + $0x98] sm:$0xff]
    %v502 = vld [vmem:[#allocation7 + $0xa0] sm:$0xff]
    %v503 = vld [vmem:[#allocation7 + $0xa8] sm:$0xff]
    %v504 = vld [vmem:[#allocation7 + $0xb0] sm:$0xff]
    %v505 = vld [vmem:[#allocation7 + $0xb8] sm:$0xff]
    %v506 = vld [vmem:[#allocation7 + $0xc0] sm:$0xff]
    %v507 = vld [vmem:[#allocation7 + $0xc8] sm:$0xff]
    %v508 = vld [vmem:[#allocation7 + $0xd0] sm:$0xff]
    %v509 = vld [vmem:[#allocation7 + $0xd8] sm:$0xff]
    %v510 = vld [vmem:[#allocation7 + $0xe0] sm:$0xff]
    %v511 = vld [vmem:[#allocation7 + $0xe8] sm:$0xff]
    %v512 = vld [vmem:[#allocation7 + $0xf0] sm:$0xff]
    %v513 = vld [vmem:[#allocation7 + $0xf8] sm:$0xff]
    %v514 = vld [vmem:[#allocation7 + $0x100] sm:$0xff]
    %v515 = vld [vmem:[#allocation7 + $0x108] sm:$0xff]
    %v516 = vld [vmem:[#allocation7 + $0x110] sm:$0xff]
    %v517 = vld [vmem:[#allocation7 + $0x118] sm:$0xff]
    %v518 = vld [vmem:[#allocation7 + $0x120] sm:$0xff]
    %v519 = vld [vmem:[#allocation7 + $0x128] sm:$0xff]
    %v520 = vld [vmem:[#allocation7 + $0x130] sm:$0xff]
    %v521 = vld [vmem:[#allocation7 + $0x138] sm:$0xff]
    %v522 = vld [vmem:[#allocation7 + $0x140] sm:$0xff]
    %v523 = vld [vmem:[#allocation7 + $0x148] sm:$0xff]
    %v524 = vld [vmem:[#allocation7 + $0x150] sm:$0xff]
    %v525 = vld [vmem:[#allocation7 + $0x158] sm:$0xff]
    %v526 = vld [vmem:[#allocation7 + $0x160] sm:$0xff]
    %v527 = vld [vmem:[#allocation7 + $0x168] sm:$0xff]
    %v528 = vld [vmem:[#allocation7 + $0x170] sm:$0xff]
    %v529 = vld [vmem:[#allocation7 + $0x178] sm:$0xff]
    %v530 = vld [vmem:[#allocation7 + $0x180] sm:$0xff]
    %v531 = vld [vmem:[#allocation7 + $0x188] sm:$0xff]
    %v532 = vld [vmem:[#allocation7 + $0x190] sm:$0xff]
    %v533 = vld [vmem:[#allocation7 + $0x198] sm:$0xff]
    %v534 = vld [vmem:[#allocation7 + $0x1a0] sm:$0xff]
    %v535 = vld [vmem:[#allocation7 + $0x1a8] sm:$0xff]
    %v536 = vld [vmem:[#allocation7 + $0x1b0] sm:$0xff]
    %v537 = vld [vmem:[#allocation7 + $0x1b8] sm:$0xff]
    %v538 = vld [vmem:[#allocation7 + $0x1c0] sm:$0xff]
    %v539 = vld [vmem:[#allocation7 + $0x1c8] sm:$0xff]
    %v540 = vld [vmem:[#allocation7 + $0x1d0] sm:$0xff]
    %v541 = vld [vmem:[#allocation7 + $0x1d8] sm:$0xff]
    %v542 = vld [vmem:[#allocation7 + $0x1e0] sm:$0xff]
    %v543 = vld [vmem:[#allocation7 + $0x1e8] sm:$0xff]
    %v544 = vld [vmem:[#allocation7 + $0x1f0] sm:$0xff]
    %v545 = vld [vmem:[#allocation7 + $0x1f8] sm:$0xff]
    %v550 = vrot.slane %v401, 7
    %v551 = vrot.slane %v403, 7
    %v552 = vrot.slane %v478, 7
    %v553 = vrot.slane %v480, 7
    %vm558 = vcmask 1040384
    %v559 = vsel %vm558, %v395, %v550
    %v560 = vsel %vm558, %v397, %v551
    %v561 = vsel %vm558, %v472, %v552
    %v562 = vsel %vm558, %v474, %v553
    %563 = vmatprep.subr.mxu0 %v483
    %564 = vmatpush1.msra.mxu0 %v482
    %565 = vmatprep.subr.mxu0 %v487
    %566 = vmatpush1.msra.mxu0 %v486
    %567 = vmatprep.subr.mxu0 %v491
    %568 = vmatpush1.msra.mxu0 %v490
    %569 = vmatprep.subr.mxu0 %v495
    %570 = vmatpush1.msra.mxu0 %v494
    %571 = vmatprep.subr.mxu0 %v499
    %572 = vmatpush1.msra.mxu0 %v498
    %573 = vmatprep.subr.mxu0 %v503
    %574 = vmatpush1.msra.mxu0 %v502
    %575 = vmatprep.subr.mxu0 %v507
    %576 = vmatpush1.msra.mxu0 %v506
    %577 = vmatprep.subr.mxu0 %v511
    %578 = vmatpush1.msra.mxu0 %v510
    %579 = vmatprep.subr.mxu0 %v515
    %580 = vmatpush1.msra.mxu0 %v514
    %581 = vmatprep.subr.mxu0 %v519
    %582 = vmatpush1.msra.mxu0 %v518
    %583 = vmatprep.subr.mxu0 %v523
    %584 = vmatpush1.msra.mxu0 %v522
    %585 = vmatprep.subr.mxu0 %v527
    %586 = vmatpush1.msra.mxu0 %v526
    %587 = vmatprep.subr.mxu0 %v531
    %588 = vmatpush1.msra.mxu0 %v530
    %589 = vmatprep.subr.mxu0 %v535
    %590 = vmatpush1.msra.mxu0 %v534
    %591 = vmatprep.subr.mxu0 %v539
    %592 = vmatpush1.msra.mxu0 %v538
    %593 = vmatprep.subr.mxu0 %v543
    %594 = vmatpush1.msra.mxu0 %v542
    %595 = vmatprep.subr.mxu0 0.0
    %596 = vmatpush1.msra.mxu0 0.0
    %597 = vmatprep.subr.mxu0 0.0
    %598 = vmatpush1.msra.mxu0 0.0
    %599 = vmatprep.subr.mxu0 0.0
    %600 = vmatpush1.msra.mxu0 0.0
    %601 = vmatprep.subr.mxu0 0.0
    %602 = vmatpush1.msra.mxu0 0.0
    %603 = vmatprep.subr.mxu0 0.0
    %604 = vmatpush1.msra.mxu0 0.0
    %605 = vmatprep.subr.mxu0 0.0
    %606 = vmatpush1.msra.mxu0 0.0
    %607 = vmatprep.subr.mxu0 0.0
    %608 = vmatpush1.msra.mxu0 0.0
    %609 = vmatprep.subr.mxu0 0.0
    %610 = vmatpush1.msra.mxu0 0.0
    %611 = vmatprep.subr.mxu0 0.0
    %612 = vmatpush1.msra.mxu0 0.0
    %613 = vmatprep.subr.mxu0 0.0
    %614 = vmatpush1.msra.mxu0 0.0
    %615 = vmatprep.subr.mxu0 0.0
    %616 = vmatpush1.msra.mxu0 0.0
    %617 = vmatprep.subr.mxu0 0.0
    %618 = vmatpush1.msra.mxu0 0.0
    %619 = vmatprep.subr.mxu0 0.0
    %620 = vmatpush1.msra.mxu0 0.0
    %621 = vmatprep.subr.mxu0 0.0
    %622 = vmatpush1.msra.mxu0 0.0
    %623 = vmatprep.subr.mxu0 0.0
    %624 = vmatpush1.msra.mxu0 0.0
    %625 = vmatprep.subr.mxu0 0.0
    %626 = vmatpush1.msra.mxu0 0.0
    %627 = vmatprep.mubr.f32.mxu0 0.0
    %628 = vmatmul.mubr.f32.gmra.mrb[0].mxu0 0.0
    %v629 = vpop.f32.mrb[0].mxu0
    %v630 = vadd.f32 0.0, %v629
    %v631 = vpop.f32.mrb[0].mxu0
    %v632 = vadd.f32 0.0, %v631
    %633 = vdwg.mxu0
    %634 = vmatprep.subr.mxu0 %v485
    %635 = vmatpush1.msra.mxu0 %v484
    %636 = vmatprep.subr.mxu0 %v489
    %637 = vmatpush1.msra.mxu0 %v488
    %638 = vmatprep.subr.mxu0 %v493
    %639 = vmatpush1.msra.mxu0 %v492
    %640 = vmatprep.subr.mxu0 %v497
    %641 = vmatpush1.msra.mxu0 %v496
    %642 = vmatprep.subr.mxu0 %v501
    %643 = vmatpush1.msra.mxu0 %v500
    %644 = vmatprep.subr.mxu0 %v505
    %645 = vmatpush1.msra.mxu0 %v504
    %646 = vmatprep.subr.mxu0 %v509
    %647 = vmatpush1.msra.mxu0 %v508
    %648 = vmatprep.subr.mxu0 %v513
    %649 = vmatpush1.msra.mxu0 %v512
    %650 = vmatprep.subr.mxu0 %v517
    %651 = vmatpush1.msra.mxu0 %v516
    %652 = vmatprep.subr.mxu0 %v521
    %653 = vmatpush1.msra.mxu0 %v520
    %654 = vmatprep.subr.mxu0 %v525
    %655 = vmatpush1.msra.mxu0 %v524
    %656 = vmatprep.subr.mxu0 %v529
    %657 = vmatpush1.msra.mxu0 %v528
    %658 = vmatprep.subr.mxu0 %v533
    %659 = vmatpush1.msra.mxu0 %v532
    %660 = vmatprep.subr.mxu0 %v537
    %661 = vmatpush1.msra.mxu0 %v536
    %662 = vmatprep.subr.mxu0 %v541
    %663 = vmatpush1.msra.mxu0 %v540
    %664 = vmatprep.subr.mxu0 %v545
    %665 = vmatpush1.msra.mxu0 %v544
    %666 = vmatprep.subr.mxu0 0.0
    %667 = vmatpush1.msra.mxu0 0.0
    %668 = vmatprep.subr.mxu0 0.0
    %669 = vmatpush1.msra.mxu0 0.0
    %670 = vmatprep.subr.mxu0 0.0
    %671 = vmatpush1.msra.mxu0 0.0
    %672 = vmatprep.subr.mxu0 0.0
    %673 = vmatpush1.msra.mxu0 0.0
    %674 = vmatprep.subr.mxu0 0.0
    %675 = vmatpush1.msra.mxu0 0.0
    %676 = vmatprep.subr.mxu0 0.0
    %677 = vmatpush1.msra.mxu0 0.0
    %678 = vmatprep.subr.mxu0 0.0
    %679 = vmatpush1.msra.mxu0 0.0
    %680 = vmatprep.subr.mxu0 0.0
    %681 = vmatpush1.msra.mxu0 0.0
    %682 = vmatprep.subr.mxu0 0.0
    %683 = vmatpush1.msra.mxu0 0.0
    %684 = vmatprep.subr.mxu0 0.0
    %685 = vmatpush1.msra.mxu0 0.0
    %686 = vmatprep.subr.mxu0 0.0
    %687 = vmatpush1.msra.mxu0 0.0
    %688 = vmatprep.subr.mxu0 0.0
    %689 = vmatpush1.msra.mxu0 0.0
    %690 = vmatprep.subr.mxu0 0.0
    %691 = vmatpush1.msra.mxu0 0.0
    %692 = vmatprep.subr.mxu0 0.0
    %693 = vmatpush1.msra.mxu0 0.0
    %694 = vmatprep.subr.mxu0 0.0
    %695 = vmatpush1.msra.mxu0 0.0
    %696 = vmatprep.subr.mxu0 0.0
    %697 = vmatpush1.msra.mxu0 0.0
    %698 = vmatprep.mubr.f32.mxu0 0.0
    %699 = vmatmul.mubr.f32.gmra.mrb[0].mxu0 0.0
    %v700 = vpop.f32.mrb[0].mxu0
    %v701 = vadd.f32 0.0, %v700
    %v702 = vpop.f32.mrb[0].mxu0
    %v703 = vadd.f32 0.0, %v702
    %704 = vdwg.mxu0
    %v705 = vadd.f32 %v559, %v630
    %v706 = vadd.f32 %v560, %v632
    %v707 = vadd.f32 %v561, %v701
    %v708 = vadd.f32 %v562, %v703
    %v709 = vmul.f32 %v705, 0.5
    %v710 = vtanh.pop %v709
    %v711 = vmul.f32 %v710, 0.5
    %v712 = vadd.f32 %v711, 0.5
    %v713 = vmul.f32 %v706, 0.5
    %v714 = vtanh.pop %v713
    %v715 = vmul.f32 %v714, 0.5
    %v716 = vadd.f32 %v715, 0.5
    %v717 = vtanh.pop %v707
    %v718 = vmul.f32 %v708, 0.5
    %v719 = vtanh.pop %v718
    %v720 = vmul.f32 %v719, 0.5
    %v721 = vadd.f32 %v720, 0.5
    %v722 = vmul.f32 %v716, 0.0
    %v723 = vmul.f32 %v712, %v717
    %v724 = vadd.f32 %v722, %v723
    %v725 = vtanh.pop %v724
    %v726 = vmul.f32 %v721, %v725
    %v731 = vrot.slane %v395, 1
    %v732 = vrot.slane %v397, 1
    %v733 = vrot.slane %v472, 1
    %v734 = vrot.slane %v474, 1
    %v739 = vsel %vm558, %v731, %v401
    %v740 = vsel %vm558, %v732, %v403
    %v741 = vsel %vm558, %v733, %v478
    %v742 = vsel %vm558, %v734, %v480
    %743 = vmatprep.subr.mxu0 %v483
    %744 = vmatpush1.msra.mxu0 %v482
    %745 = vmatprep.subr.mxu0 %v487
    %746 = vmatpush1.msra.mxu0 %v486
    %747 = vmatprep.subr.mxu0 %v491
    %748 = vmatpush1.msra.mxu0 %v490
    %749 = vmatprep.subr.mxu0 %v495
    %750 = vmatpush1.msra.mxu0 %v494
    %751 = vmatprep.subr.mxu0 %v499
    %752 = vmatpush1.msra.mxu0 %v498
    %753 = vmatprep.subr.mxu0 %v503
    %754 = vmatpush1.msra.mxu0 %v502
    %755 = vmatprep.subr.mxu0 %v507
    %756 = vmatpush1.msra.mxu0 %v506
    %757 = vmatprep.subr.mxu0 %v511
    %758 = vmatpush1.msra.mxu0 %v510
    %759 = vmatprep.subr.mxu0 %v515
    %760 = vmatpush1.msra.mxu0 %v514
    %761 = vmatprep.subr.mxu0 %v519
    %762 = vmatpush1.msra.mxu0 %v518
    %763 = vmatprep.subr.mxu0 %v523
    %764 = vmatpush1.msra.mxu0 %v522
    %765 = vmatprep.subr.mxu0 %v527
    %766 = vmatpush1.msra.mxu0 %v526
    %767 = vmatprep.subr.mxu0 %v531
    %768 = vmatpush1.msra.mxu0 %v530
    %769 = vmatprep.subr.mxu0 %v535
    %770 = vmatpush1.msra.mxu0 %v534
    %771 = vmatprep.subr.mxu0 %v539
    %772 = vmatpush1.msra.mxu0 %v538
    %773 = vmatprep.subr.mxu0 %v543
    %774 = vmatpush1.msra.mxu0 %v542
    %775 = vmatprep.subr.mxu0 0.0
    %776 = vmatpush1.msra.mxu0 0.0
    %777 = vmatprep.subr.mxu0 0.0
    %778 = vmatpush1.msra.mxu0 0.0
    %779 = vmatprep.subr.mxu0 0.0
    %780 = vmatpush1.msra.mxu0 0.0
    %781 = vmatprep.subr.mxu0 0.0
    %782 = vmatpush1.msra.mxu0 0.0
    %783 = vmatprep.subr.mxu0 0.0
    %784 = vmatpush1.msra.mxu0 0.0
    %785 = vmatprep.subr.mxu0 0.0
    %786 = vmatpush1.msra.mxu0 0.0
    %787 = vmatprep.subr.mxu0 0.0
    %788 = vmatpush1.msra.mxu0 0.0
    %789 = vmatprep.subr.mxu0 0.0
    %790 = vmatpush1.msra.mxu0 0.0
    %791 = vmatprep.subr.mxu0 0.0
    %792 = vmatpush1.msra.mxu0 0.0
    %793 = vmatprep.subr.mxu0 0.0
    %794 = vmatpush1.msra.mxu0 0.0
    %795 = vmatprep.subr.mxu0 0.0
    %796 = vmatpush1.msra.mxu0 0.0
    %797 = vmatprep.subr.mxu0 0.0
    %798 = vmatpush1.msra.mxu0 0.0
    %799 = vmatprep.subr.mxu0 0.0
    %800 = vmatpush1.msra.mxu0 0.0
    %801 = vmatprep.subr.mxu0 0.0
    %802 = vmatpush1.msra.mxu0 0.0
    %803 = vmatprep.subr.mxu0 0.0
    %804 = vmatpush1.msra.mxu0 0.0
    %805 = vmatprep.subr.mxu0 0.0
    %806 = vmatpush1.msra.mxu0 0.0
    %807 = vmatprep.mubr.f32.mxu0 0.0
    %808 = vmatmul.mubr.f32.gmra.mrb[0].mxu0 %v726
    %v809 = vpop.f32.mrb[0].mxu0
    %v810 = vadd.f32 0.0, %v809
    %v811 = vpop.f32.mrb[0].mxu0
    %v812 = vadd.f32 0.0, %v811
    %813 = vdwg.mxu0
    %814 = vmatprep.subr.mxu0 %v485
    %815 = vmatpush1.msra.mxu0 %v484
    %816 = vmatprep.subr.mxu0 %v489
    %817 = vmatpush1.msra.mxu0 %v488
    %818 = vmatprep.subr.mxu0 %v493
    %819 = vmatpush1.msra.mxu0 %v492
    %820 = vmatprep.subr.mxu0 %v497
    %821 = vmatpush1.msra.mxu0 %v496
    %822 = vmatprep.subr.mxu0 %v501
    %823 = vmatpush1.msra.mxu0 %v500
    %824 = vmatprep.subr.mxu0 %v505
    %825 = vmatpush1.msra.mxu0 %v504
    %826 = vmatprep.subr.mxu0 %v509
    %827 = vmatpush1.msra.mxu0 %v508
    %828 = vmatprep.subr.mxu0 %v513
    %829 = vmatpush1.msra.mxu0 %v512
    %830 = vmatprep.subr.mxu0 %v517
    %831 = vmatpush1.msra.mxu0 %v516
    %832 = vmatprep.subr.mxu0 %v521
    %833 = vmatpush1.msra.mxu0 %v520
    %834 = vmatprep.subr.mxu0 %v525
    %835 = vmatpush1.msra.mxu0 %v524
    %836 = vmatprep.subr.mxu0 %v529
    %837 = vmatpush1.msra.mxu0 %v528
    %838 = vmatprep.subr.mxu0 %v533
    %839 = vmatpush1.msra.mxu0 %v532
    %840 = vmatprep.subr.mxu0 %v537
    %841 = vmatpush1.msra.mxu0 %v536
    %842 = vmatprep.subr.mxu0 %v541
    %843 = vmatpush1.msra.mxu0 %v540
    %844 = vmatprep.subr.mxu0 %v545
    %845 = vmatpush1.msra.mxu0 %v544
    %846 = vmatprep.subr.mxu0 0.0
    %847 = vmatpush1.msra.mxu0 0.0
    %848 = vmatprep.subr.mxu0 0.0
    %849 = vmatpush1.msra.mxu0 0.0
    %850 = vmatprep.subr.mxu0 0.0
    %851 = vmatpush1.msra.mxu0 0.0
    %852 = vmatprep.subr.mxu0 0.0
    %853 = vmatpush1.msra.mxu0 0.0
    %854 = vmatprep.subr.mxu0 0.0
    %855 = vmatpush1.msra.mxu0 0.0
    %856 = vmatprep.subr.mxu0 0.0
    %857 = vmatpush1.msra.mxu0 0.0
    %858 = vmatprep.subr.mxu0 0.0
    %859 = vmatpush1.msra.mxu0 0.0
    %860 = vmatprep.subr.mxu0 0.0
    %861 = vmatpush1.msra.mxu0 0.0
    %862 = vmatprep.subr.mxu0 0.0
    %863 = vmatpush1.msra.mxu0 0.0
    %864 = vmatprep.subr.mxu0 0.0
    %865 = vmatpush1.msra.mxu0 0.0
    %866 = vmatprep.subr.mxu0 0.0
    %867 = vmatpush1.msra.mxu0 0.0
    %868 = vmatprep.subr.mxu0 0.0
    %869 = vmatpush1.msra.mxu0 0.0
    %870 = vmatprep.subr.mxu0 0.0
    %871 = vmatpush1.msra.mxu0 0.0
    %872 = vmatprep.subr.mxu0 0.0
    %873 = vmatpush1.msra.mxu0 0.0
    %874 = vmatprep.subr.mxu0 0.0
    %875 = vmatpush1.msra.mxu0 0.0
    %876 = vmatprep.subr.mxu0 0.0
    %877 = vmatpush1.msra.mxu0 0.0
    %878 = vmatprep.mubr.f32.mxu0 0.0
    %879 = vmatmul.mubr.f32.gmra.mrb[0].mxu0 %v726
    %v880 = vpop.f32.mrb[0].mxu0
    %v881 = vadd.f32 0.0, %v880
    %v882 = vpop.f32.mrb[0].mxu0
    %v883 = vadd.f32 0.0, %v882
    %884 = vdwg.mxu0
    %v885 = vadd.f32 %v739, %v810
    %v886 = vadd.f32 %v740, %v812
    %v887 = vadd.f32 %v741, %v881
    %v888 = vadd.f32 %v742, %v883
    %v889 = vmul.f32 %v885, 0.5
    %v890 = vtanh.pop %v889
    %v891 = vmul.f32 %v890, 0.5
    %v892 = vadd.f32 %v891, 0.5
    %v893 = vmul.f32 %v886, 0.5
    %v894 = vtanh.pop %v893
    %v895 = vmul.f32 %v894, 0.5
    %v896 = vadd.f32 %v895, 0.5
    %v897 = vtanh.pop %v887
    %v898 = vmul.f32 %v888, 0.5
    %v899 = vtanh.pop %v898
    %v900 = vmul.f32 %v899, 0.5
    %v901 = vadd.f32 %v900, 0.5
    %v902 = vmul.f32 %v896, %v724
    %v903 = vmul.f32 %v892, %v897
    %v904 = vadd.f32 %v902, %v903
    %v905 = vtanh.pop %v904
    %v906 = vmul.f32 %v901, %v905
    %v907 = vrot.slane %v395, 2
    %v908 = vrot.slane %v397, 2
    %v909 = vrot.slane %v472, 2
    %v910 = vrot.slane %v474, 2
    %v915 = vrot.slane %v401, 1
    %v916 = vrot.slane %v403, 1
    %v917 = vrot.slane %v478, 1
    %v918 = vrot.slane %v480, 1
    %v923 = vsel %vm558, %v907, %v915
    %v924 = vsel %vm558, %v908, %v916
    %v925 = vsel %vm558, %v909, %v917
    %v926 = vsel %vm558, %v910, %v918
    %927 = vmatprep.subr.mxu0 %v483
    %928 = vmatpush1.msra.mxu0 %v482
    %929 = vmatprep.subr.mxu0 %v487
    %930 = vmatpush1.msra.mxu0 %v486
    %931 = vmatprep.subr.mxu0 %v491
    %932 = vmatpush1.msra.mxu0 %v490
    %933 = vmatprep.subr.mxu0 %v495
    %934 = vmatpush1.msra.mxu0 %v494
    %935 = vmatprep.subr.mxu0 %v499
    %936 = vmatpush1.msra.mxu0 %v498
    %937 = vmatprep.subr.mxu0 %v503
    %938 = vmatpush1.msra.mxu0 %v502
    %939 = vmatprep.subr.mxu0 %v507
    %940 = vmatpush1.msra.mxu0 %v506
    %941 = vmatprep.subr.mxu0 %v511
    %942 = vmatpush1.msra.mxu0 %v510
    %943 = vmatprep.subr.mxu0 %v515
    %944 = vmatpush1.msra.mxu0 %v514
    %945 = vmatprep.subr.mxu0 %v519
    %946 = vmatpush1.msra.mxu0 %v518
    %947 = vmatprep.subr.mxu0 %v523
    %948 = vmatpush1.msra.mxu0 %v522
    %949 = vmatprep.subr.mxu0 %v527
    %950 = vmatpush1.msra.mxu0 %v526
    %951 = vmatprep.subr.mxu0 %v531
    %952 = vmatpush1.msra.mxu0 %v530
    %953 = vmatprep.subr.mxu0 %v535
    %954 = vmatpush1.msra.mxu0 %v534
    %955 = vmatprep.subr.mxu0 %v539
    %956 = vmatpush1.msra.mxu0 %v538
    %957 = vmatprep.subr.mxu0 %v543
    %958 = vmatpush1.msra.mxu0 %v542
    %959 = vmatprep.subr.mxu0 0.0
    %960 = vmatpush1.msra.mxu0 0.0
    %961 = vmatprep.subr.mxu0 0.0
    %962 = vmatpush1.msra.mxu0 0.0
    %963 = vmatprep.subr.mxu0 0.0
    %964 = vmatpush1.msra.mxu0 0.0
    %965 = vmatprep.subr.mxu0 0.0
    %966 = vmatpush1.msra.mxu0 0.0
    %967 = vmatprep.subr.mxu0 0.0
    %968 = vmatpush1.msra.mxu0 0.0
    %969 = vmatprep.subr.mxu0 0.0
    %970 = vmatpush1.msra.mxu0 0.0
    %971 = vmatprep.subr.mxu0 0.0
    %972 = vmatpush1.msra.mxu0 0.0
    %973 = vmatprep.subr.mxu0 0.0
    %974 = vmatpush1.msra.mxu0 0.0
    %975 = vmatprep.subr.mxu0 0.0
    %976 = vmatpush1.msra.mxu0 0.0
    %977 = vmatprep.subr.mxu0 0.0
    %978 = vmatpush1.msra.mxu0 0.0
    %979 = vmatprep.subr.mxu0 0.0
    %980 = vmatpush1.msra.mxu0 0.0
    %981 = vmatprep.subr.mxu0 0.0
    %982 = vmatpush1.msra.mxu0 0.0
    %983 = vmatprep.subr.mxu0 0.0
    %984 = vmatpush1.msra.mxu0 0.0
    %985 = vmatprep.subr.mxu0 0.0
    %986 = vmatpush1.msra.mxu0 0.0
    %987 = vmatprep.subr.mxu0 0.0
    %988 = vmatpush1.msra.mxu0 0.0
    %989 = vmatprep.subr.mxu0 0.0
    %990 = vmatpush1.msra.mxu0 0.0
    %991 = vmatprep.mubr.f32.mxu0 0.0
    %992 = vmatmul.mubr.f32.gmra.mrb[0].mxu0 %v906
    %v993 = vpop.f32.mrb[0].mxu0
    %v994 = vadd.f32 0.0, %v993
    %v995 = vpop.f32.mrb[0].mxu0
    %v996 = vadd.f32 0.0, %v995
    %997 = vdwg.mxu0
    %998 = vmatprep.subr.mxu0 %v485
    %999 = vmatpush1.msra.mxu0 %v484
    %1000 = vmatprep.subr.mxu0 %v489
    %1001 = vmatpush1.msra.mxu0 %v488
    %1002 = vmatprep.subr.mxu0 %v493
    %1003 = vmatpush1.msra.mxu0 %v492
    %1004 = vmatprep.subr.mxu0 %v497
    %1005 = vmatpush1.msra.mxu0 %v496
    %1006 = vmatprep.subr.mxu0 %v501
    %1007 = vmatpush1.msra.mxu0 %v500
    %1008 = vmatprep.subr.mxu0 %v505
    %1009 = vmatpush1.msra.mxu0 %v504
    %1010 = vmatprep.subr.mxu0 %v509
    %1011 = vmatpush1.msra.mxu0 %v508
    %1012 = vmatprep.subr.mxu0 %v513
    %1013 = vmatpush1.msra.mxu0 %v512
    %1014 = vmatprep.subr.mxu0 %v517
    %1015 = vmatpush1.msra.mxu0 %v516
    %1016 = vmatprep.subr.mxu0 %v521
    %1017 = vmatpush1.msra.mxu0 %v520
    %1018 = vmatprep.subr.mxu0 %v525
    %1019 = vmatpush1.msra.mxu0 %v524
    %1020 = vmatprep.subr.mxu0 %v529
    %1021 = vmatpush1.msra.mxu0 %v528
    %1022 = vmatprep.subr.mxu0 %v533
    %1023 = vmatpush1.msra.mxu0 %v532
    %1024 = vmatprep.subr.mxu0 %v537
    %1025 = vmatpush1.msra.mxu0 %v536
    %1026 = vmatprep.subr.mxu0 %v541
    %1027 = vmatpush1.msra.mxu0 %v540
    %1028 = vmatprep.subr.mxu0 %v545
    %1029 = vmatpush1.msra.mxu0 %v544
    %1030 = vmatprep.subr.mxu0 0.0
    %1031 = vmatpush1.msra.mxu0 0.0
    %1032 = vmatprep.subr.mxu0 0.0
    %1033 = vmatpush1.msra.mxu0 0.0
    %1034 = vmatprep.subr.mxu0 0.0
    %1035 = vmatpush1.msra.mxu0 0.0
    %1036 = vmatprep.subr.mxu0 0.0
    %1037 = vmatpush1.msra.mxu0 0.0
    %1038 = vmatprep.subr.mxu0 0.0
    %1039 = vmatpush1.msra.mxu0 0.0
    %1040 = vmatprep.subr.mxu0 0.0
    %1041 = vmatpush1.msra.mxu0 0.0
    %1042 = vmatprep.subr.mxu0 0.0
    %1043 = vmatpush1.msra.mxu0 0.0
    %1044 = vmatprep.subr.mxu0 0.0
    %1045 = vmatpush1.msra.mxu0 0.0
    %1046 = vmatprep.subr.mxu0 0.0
    %1047 = vmatpush1.msra.mxu0 0.0
    %1048 = vmatprep.subr.mxu0 0.0
    %1049 = vmatpush1.msra.mxu0 0.0
    %1050 = vmatprep.subr.mxu0 0.0
    %1051 = vmatpush1.msra.mxu0 0.0
    %1052 = vmatprep.subr.mxu0 0.0
    %1053 = vmatpush1.msra.mxu0 0.0
    %1054 = vmatprep.subr.mxu0 0.0
    %1055 = vmatpush1.msra.mxu0 0.0
    %1056 = vmatprep.subr.mxu0 0.0
    %1057 = vmatpush1.msra.mxu0 0.0
    %1058 = vmatprep.subr.mxu0 0.0
    %1059 = vmatpush1.msra.mxu0 0.0
    %1060 = vmatprep.subr.mxu0 0.0
    %1061 = vmatpush1.msra.mxu0 0.0
    %1062 = vmatprep.mubr.f32.mxu0 0.0
    %1063 = vmatmul.mubr.f32.gmra.mrb[0].mxu0 %v906
    %v1064 = vpop.f32.mrb[0].mxu0
    %v1065 = vadd.f32 0.0, %v1064
    %v1066 = vpop.f32.mrb[0].mxu0
    %v1067 = vadd.f32 0.0, %v1066
    %1068 = vdwg.mxu0
    %v1069 = vadd.f32 %v923, %v994
    %v1070 = vadd.f32 %v924, %v996
    %v1071 = vadd.f32 %v925, %v1065
    %v1072 = vadd.f32 %v926, %v1067
    %v1073 = vmul.f32 %v1069, 0.5
    %v1074 = vtanh.pop %v1073
    %v1075 = vmul.f32 %v1074, 0.5
    %v1076 = vadd.f32 %v1075, 0.5
    %v1077 = vmul.f32 %v1070, 0.5
    %v1078 = vtanh.pop %v1077
    %v1079 = vmul.f32 %v1078, 0.5
    %v1080 = vadd.f32 %v1079, 0.5
    %v1081 = vtanh.pop %v1071
    %v1082 = vmul.f32 %v1072, 0.5
    %v1083 = vtanh.pop %v1082
    %v1084 = vmul.f32 %v1083, 0.5
    %v1085 = vadd.f32 %v1084, 0.5
    %v1086 = vmul.f32 %v1080, %v904
    %v1087 = vmul.f32 %v1076, %v1081
    %v1088 = vadd.f32 %v1086, %v1087
    %v1089 = vtanh.pop %v1088
    %v1090 = vmul.f32 %v1085, %v1089
    %v1091 = vrot.slane %v395, 3
    %v1092 = vrot.slane %v397, 3
    %v1093 = vrot.slane %v472, 3
    %v1094 = vrot.slane %v474, 3
    %v1099 = vrot.slane %v401, 2
    %v1100 = vrot.slane %v403, 2
    %v1101 = vrot.slane %v478, 2
    %v1102 = vrot.slane %v480, 2
    %v1107 = vsel %vm558, %v1091, %v1099
    %v1108 = vsel %vm558, %v1092, %v1100
    %v1109 = vsel %vm558, %v1093, %v1101
    %v1110 = vsel %vm558, %v1094, %v1102
    %1111 = vmatprep.subr.mxu0 %v483
    %1112 = vmatpush1.msra.mxu0 %v482
    %1113 = vmatprep.subr.mxu0 %v487
    %1114 = vmatpush1.msra.mxu0 %v486
    %1115 = vmatprep.subr.mxu0 %v491
    %1116 = vmatpush1.msra.mxu0 %v490
    %1117 = vmatprep.subr.mxu0 %v495
    %1118 = vmatpush1.msra.mxu0 %v494
    %1119 = vmatprep.subr.mxu0 %v499
    %1120 = vmatpush1.msra.mxu0 %v498
    %1121 = vmatprep.subr.mxu0 %v503
    %1122 = vmatpush1.msra.mxu0 %v502
    %1123 = vmatprep.subr.mxu0 %v507
    %1124 = vmatpush1.msra.mxu0 %v506
    %1125 = vmatprep.subr.mxu0 %v511
    %1126 = vmatpush1.msra.mxu0 %v510
    %1127 = vmatprep.subr.mxu0 %v515
    %1128 = vmatpush1.msra.mxu0 %v514
    %1129 = vmatprep.subr.mxu0 %v519
    %1130 = vmatpush1.msra.mxu0 %v518
    %1131 = vmatprep.subr.mxu0 %v523
    %1132 = vmatpush1.msra.mxu0 %v522
    %1133 = vmatprep.subr.mxu0 %v527
    %1134 = vmatpush1.msra.mxu0 %v526
    %1135 = vmatprep.subr.mxu0 %v531
    %1136 = vmatpush1.msra.mxu0 %v530
    %1137 = vmatprep.subr.mxu0 %v535
    %1138 = vmatpush1.msra.mxu0 %v534
    %1139 = vmatprep.subr.mxu0 %v539
    %1140 = vmatpush1.msra.mxu0 %v538
    %1141 = vmatprep.subr.mxu0 %v543
    %1142 = vmatpush1.msra.mxu0 %v542
    %1143 = vmatprep.subr.mxu0 0.0
    %1144 = vmatpush1.msra.mxu0 0.0
    %1145 = vmatprep.subr.mxu0 0.0
    %1146 = vmatpush1.msra.mxu0 0.0
    %1147 = vmatprep.subr.mxu0 0.0
    %1148 = vmatpush1.msra.mxu0 0.0
    %1149 = vmatprep.subr.mxu0 0.0
    %1150 = vmatpush1.msra.mxu0 0.0
    %1151 = vmatprep.subr.mxu0 0.0
    %1152 = vmatpush1.msra.mxu0 0.0
    %1153 = vmatprep.subr.mxu0 0.0
    %1154 = vmatpush1.msra.mxu0 0.0
    %1155 = vmatprep.subr.mxu0 0.0
    %1156 = vmatpush1.msra.mxu0 0.0
    %1157 = vmatprep.subr.mxu0 0.0
    %1158 = vmatpush1.msra.mxu0 0.0
    %1159 = vmatprep.subr.mxu0 0.0
    %1160 = vmatpush1.msra.mxu0 0.0
    %1161 = vmatprep.subr.mxu0 0.0
    %1162 = vmatpush1.msra.mxu0 0.0
    %1163 = vmatprep.subr.mxu0 0.0
    %1164 = vmatpush1.msra.mxu0 0.0
    %1165 = vmatprep.subr.mxu0 0.0
    %1166 = vmatpush1.msra.mxu0 0.0
    %1167 = vmatprep.subr.mxu0 0.0
    %1168 = vmatpush1.msra.mxu0 0.0
    %1169 = vmatprep.subr.mxu0 0.0
    %1170 = vmatpush1.msra.mxu0 0.0
    %1171 = vmatprep.subr.mxu0 0.0
    %1172 = vmatpush1.msra.mxu0 0.0
    %1173 = vmatprep.subr.mxu0 0.0
    %1174 = vmatpush1.msra.mxu0 0.0
    %1175 = vmatprep.mubr.f32.mxu0 0.0
    %1176 = vmatmul.mubr.f32.gmra.mrb[0].mxu0 %v1090
    %v1177 = vpop.f32.mrb[0].mxu0
    %v1178 = vadd.f32 0.0, %v1177
    %v1179 = vpop.f32.mrb[0].mxu0
    %v1180 = vadd.f32 0.0, %v1179
    %1181 = vdwg.mxu0
    %1182 = vmatprep.subr.mxu0 %v485
    %1183 = vmatpush1.msra.mxu0 %v484
    %1184 = vmatprep.subr.mxu0 %v489
    %1185 = vmatpush1.msra.mxu0 %v488
    %1186 = vmatprep.subr.mxu0 %v493
    %1187 = vmatpush1.msra.mxu0 %v492
    %1188 = vmatprep.subr.mxu0 %v497
    %1189 = vmatpush1.msra.mxu0 %v496
    %1190 = vmatprep.subr.mxu0 %v501
    %1191 = vmatpush1.msra.mxu0 %v500
    %1192 = vmatprep.subr.mxu0 %v505
    %1193 = vmatpush1.msra.mxu0 %v504
    %1194 = vmatprep.subr.mxu0 %v509
    %1195 = vmatpush1.msra.mxu0 %v508
    %1196 = vmatprep.subr.mxu0 %v513
    %1197 = vmatpush1.msra.mxu0 %v512
    %1198 = vmatprep.subr.mxu0 %v517
    %1199 = vmatpush1.msra.mxu0 %v516
    %1200 = vmatprep.subr.mxu0 %v521
    %1201 = vmatpush1.msra.mxu0 %v520
    %1202 = vmatprep.subr.mxu0 %v525
    %1203 = vmatpush1.msra.mxu0 %v524
    %1204 = vmatprep.subr.mxu0 %v529
    %1205 = vmatpush1.msra.mxu0 %v528
    %1206 = vmatprep.subr.mxu0 %v533
    %1207 = vmatpush1.msra.mxu0 %v532
    %1208 = vmatprep.subr.mxu0 %v537
    %1209 = vmatpush1.msra.mxu0 %v536
    %1210 = vmatprep.subr.mxu0 %v541
    %1211 = vmatpush1.msra.mxu0 %v540
    %1212 = vmatprep.subr.mxu0 %v545
    %1213 = vmatpush1.msra.mxu0 %v544
    %1214 = vmatprep.subr.mxu0 0.0
    %1215 = vmatpush1.msra.mxu0 0.0
    %1216 = vmatprep.subr.mxu0 0.0
    %1217 = vmatpush1.msra.mxu0 0.0
    %1218 = vmatprep.subr.mxu0 0.0
    %1219 = vmatpush1.msra.mxu0 0.0
    %1220 = vmatprep.subr.mxu0 0.0
    %1221 = vmatpush1.msra.mxu0 0.0
    %1222 = vmatprep.subr.mxu0 0.0
    %1223 = vmatpush1.msra.mxu0 0.0
    %1224 = vmatprep.subr.mxu0 0.0
    %1225 = vmatpush1.msra.mxu0 0.0
    %1226 = vmatprep.subr.mxu0 0.0
    %1227 = vmatpush1.msra.mxu0 0.0
    %1228 = vmatprep.subr.mxu0 0.0
    %1229 = vmatpush1.msra.mxu0 0.0
    %1230 = vmatprep.subr.mxu0 0.0
    %1231 = vmatpush1.msra.mxu0 0.0
    %1232 = vmatprep.subr.mxu0 0.0
    %1233 = vmatpush1.msra.mxu0 0.0
    %1234 = vmatprep.subr.mxu0 0.0
    %1235 = vmatpush1.msra.mxu0 0.0
    %1236 = vmatprep.subr.mxu0 0.0
    %1237 = vmatpush1.msra.mxu0 0.0
    %1238 = vmatprep.subr.mxu0 0.0
    %1239 = vmatpush1.msra.mxu0 0.0
    %1240 = vmatprep.subr.mxu0 0.0
    %1241 = vmatpush1.msra.mxu0 0.0
    %1242 = vmatprep.subr.mxu0 0.0
    %1243 = vmatpush1.msra.mxu0 0.0
    %1244 = vmatprep.subr.mxu0 0.0
    %1245 = vmatpush1.msra.mxu0 0.0
    %1246 = vmatprep.mubr.f32.mxu0 0.0
    %1247 = vmatmul.mubr.f32.gmra.mrb[0].mxu0 %v1090
    %v1248 = vpop.f32.mrb[0].mxu0
    %v1249 = vadd.f32 0.0, %v1248
    %v1250 = vpop.f32.mrb[0].mxu0
    %v1251 = vadd.f32 0.0, %v1250
    %1252 = vdwg.mxu0
    %v1253 = vadd.f32 %v1107, %v1178
    %v1254 = vadd.f32 %v1108, %v1180
    %v1255 = vadd.f32 %v1109, %v1249
    %v1256 = vadd.f32 %v1110, %v1251
    %v1257 = vmul.f32 %v1253, 0.5
    %v1258 = vtanh.pop %v1257
    %v1259 = vmul.f32 %v1258, 0.5
    %v1260 = vadd.f32 %v1259, 0.5
    %v1261 = vmul.f32 %v1254, 0.5
    %v1262 = vtanh.pop %v1261
    %v1263 = vmul.f32 %v1262, 0.5
    %v1264 = vadd.f32 %v1263, 0.5
    %v1265 = vtanh.pop %v1255
    %v1266 = vmul.f32 %v1256, 0.5
    %v1267 = vtanh.pop %v1266
    %v1268 = vmul.f32 %v1267, 0.5
    %v1269 = vadd.f32 %v1268, 0.5
    %v1270 = vmul.f32 %v1264, %v1088
    %v1271 = vmul.f32 %v1260, %v1265
    %v1272 = vadd.f32 %v1270, %v1271
    %v1273 = vtanh.pop %v1272
    %v1274 = vmul.f32 %v1269, %v1273
    %v1275 = vrot.slane %v395, 4
    %v1276 = vrot.slane %v397, 4
    %v1277 = vrot.slane %v472, 4
    %v1278 = vrot.slane %v474, 4
    %v1283 = vrot.slane %v401, 3
    %v1284 = vrot.slane %v403, 3
    %v1285 = vrot.slane %v478, 3
    %v1286 = vrot.slane %v480, 3
    %v1291 = vsel %vm558, %v1275, %v1283
    %v1292 = vsel %vm558, %v1276, %v1284
    %v1293 = vsel %vm558, %v1277, %v1285
    %v1294 = vsel %vm558, %v1278, %v1286
    %1295 = vmatprep.subr.mxu0 %v483
    %1296 = vmatpush1.msra.mxu0 %v482
    %1297 = vmatprep.subr.mxu0 %v487
    %1298 = vmatpush1.msra.mxu0 %v486
    %1299 = vmatprep.subr.mxu0 %v491
    %1300 = vmatpush1.msra.mxu0 %v490
    %1301 = vmatprep.subr.mxu0 %v495
    %1302 = vmatpush1.msra.mxu0 %v494
    %1303 = vmatprep.subr.mxu0 %v499
    %1304 = vmatpush1.msra.mxu0 %v498
    %1305 = vmatprep.subr.mxu0 %v503
    %1306 = vmatpush1.msra.mxu0 %v502
    %1307 = vmatprep.subr.mxu0 %v507
    %1308 = vmatpush1.msra.mxu0 %v506
    %1309 = vmatprep.subr.mxu0 %v511
    %1310 = vmatpush1.msra.mxu0 %v510
    %1311 = vmatprep.subr.mxu0 %v515
    %1312 = vmatpush1.msra.mxu0 %v514
    %1313 = vmatprep.subr.mxu0 %v519
    %1314 = vmatpush1.msra.mxu0 %v518
    %1315 = vmatprep.subr.mxu0 %v523
    %1316 = vmatpush1.msra.mxu0 %v522
    %1317 = vmatprep.subr.mxu0 %v527
    %1318 = vmatpush1.msra.mxu0 %v526
    %1319 = vmatprep.subr.mxu0 %v531
    %1320 = vmatpush1.msra.mxu0 %v530
    %1321 = vmatprep.subr.mxu0 %v535
    %1322 = vmatpush1.msra.mxu0 %v534
    %1323 = vmatprep.subr.mxu0 %v539
    %1324 = vmatpush1.msra.mxu0 %v538
    %1325 = vmatprep.subr.mxu0 %v543
    %1326 = vmatpush1.msra.mxu0 %v542
    %1327 = vmatprep.subr.mxu0 0.0
    %1328 = vmatpush1.msra.mxu0 0.0
    %1329 = vmatprep.subr.mxu0 0.0
    %1330 = vmatpush1.msra.mxu0 0.0
    %1331 = vmatprep.subr.mxu0 0.0
    %1332 = vmatpush1.msra.mxu0 0.0
    %1333 = vmatprep.subr.mxu0 0.0
    %1334 = vmatpush1.msra.mxu0 0.0
    %1335 = vmatprep.subr.mxu0 0.0
    %1336 = vmatpush1.msra.mxu0 0.0
    %1337 = vmatprep.subr.mxu0 0.0
    %1338 = vmatpush1.msra.mxu0 0.0
    %1339 = vmatprep.subr.mxu0 0.0
    %1340 = vmatpush1.msra.mxu0 0.0
    %1341 = vmatprep.subr.mxu0 0.0
    %1342 = vmatpush1.msra.mxu0 0.0
    %1343 = vmatprep.subr.mxu0 0.0
    %1344 = vmatpush1.msra.mxu0 0.0
    %1345 = vmatprep.subr.mxu0 0.0
    %1346 = vmatpush1.msra.mxu0 0.0
    %1347 = vmatprep.subr.mxu0 0.0
    %1348 = vmatpush1.msra.mxu0 0.0
    %1349 = vmatprep.subr.mxu0 0.0
    %1350 = vmatpush1.msra.mxu0 0.0
    %1351 = vmatprep.subr.mxu0 0.0
    %1352 = vmatpush1.msra.mxu0 0.0
    %1353 = vmatprep.subr.mxu0 0.0
    %1354 = vmatpush1.msra.mxu0 0.0
    %1355 = vmatprep.subr.mxu0 0.0
    %1356 = vmatpush1.msra.mxu0 0.0
    %1357 = vmatprep.subr.mxu0 0.0
    %1358 = vmatpush1.msra.mxu0 0.0
    %1359 = vmatprep.mubr.f32.mxu0 0.0
    %1360 = vmatmul.mubr.f32.gmra.mrb[0].mxu0 %v1274
    %v1361 = vpop.f32.mrb[0].mxu0
    %v1362 = vadd.f32 0.0, %v1361
    %v1363 = vpop.f32.mrb[0].mxu0
    %v1364 = vadd.f32 0.0, %v1363
    %1365 = vdwg.mxu0
    %1366 = vmatprep.subr.mxu0 %v485
    %1367 = vmatpush1.msra.mxu0 %v484
    %1368 = vmatprep.subr.mxu0 %v489
    %1369 = vmatpush1.msra.mxu0 %v488
    %1370 = vmatprep.subr.mxu0 %v493
    %1371 = vmatpush1.msra.mxu0 %v492
    %1372 = vmatprep.subr.mxu0 %v497
    %1373 = vmatpush1.msra.mxu0 %v496
    %1374 = vmatprep.subr.mxu0 %v501
    %1375 = vmatpush1.msra.mxu0 %v500
    %1376 = vmatprep.subr.mxu0 %v505
    %1377 = vmatpush1.msra.mxu0 %v504
    %1378 = vmatprep.subr.mxu0 %v509
    %1379 = vmatpush1.msra.mxu0 %v508
    %1380 = vmatprep.subr.mxu0 %v513
    %1381 = vmatpush1.msra.mxu0 %v512
    %1382 = vmatprep.subr.mxu0 %v517
    %1383 = vmatpush1.msra.mxu0 %v516
    %1384 = vmatprep.subr.mxu0 %v521
    %1385 = vmatpush1.msra.mxu0 %v520
    %1386 = vmatprep.subr.mxu0 %v525
    %1387 = vmatpush1.msra.mxu0 %v524
    %1388 = vmatprep.subr.mxu0 %v529
    %1389 = vmatpush1.msra.mxu0 %v528
    %1390 = vmatprep.subr.mxu0 %v533
    %1391 = vmatpush1.msra.mxu0 %v532
    %1392 = vmatprep.subr.mxu0 %v537
    %1393 = vmatpush1.msra.mxu0 %v536
    %1394 = vmatprep.subr.mxu0 %v541
    %1395 = vmatpush1.msra.mxu0 %v540
    %1396 = vmatprep.subr.mxu0 %v545
    %1397 = vmatpush1.msra.mxu0 %v544
    %1398 = vmatprep.subr.mxu0 0.0
    %1399 = vmatpush1.msra.mxu0 0.0
    %1400 = vmatprep.subr.mxu0 0.0
    %1401 = vmatpush1.msra.mxu0 0.0
    %1402 = vmatprep.subr.mxu0 0.0
    %1403 = vmatpush1.msra.mxu0 0.0
    %1404 = vmatprep.subr.mxu0 0.0
    %1405 = vmatpush1.msra.mxu0 0.0
    %1406 = vmatprep.subr.mxu0 0.0
    %1407 = vmatpush1.msra.mxu0 0.0
    %1408 = vmatprep.subr.mxu0 0.0
    %1409 = vmatpush1.msra.mxu0 0.0
    %1410 = vmatprep.subr.mxu0 0.0
    %1411 = vmatpush1.msra.mxu0 0.0
    %1412 = vmatprep.subr.mxu0 0.0
    %1413 = vmatpush1.msra.mxu0 0.0
    %1414 = vmatprep.subr.mxu0 0.0
    %1415 = vmatpush1.msra.mxu0 0.0
    %1416 = vmatprep.subr.mxu0 0.0
    %1417 = vmatpush1.msra.mxu0 0.0
    %1418 = vmatprep.subr.mxu0 0.0
    %1419 = vmatpush1.msra.mxu0 0.0
    %1420 = vmatprep.subr.mxu0 0.0
    %1421 = vmatpush1.msra.mxu0 0.0
    %1422 = vmatprep.subr.mxu0 0.0
    %1423 = vmatpush1.msra.mxu0 0.0
    %1424 = vmatprep.subr.mxu0 0.0
    %1425 = vmatpush1.msra.mxu0 0.0
    %1426 = vmatprep.subr.mxu0 0.0
    %1427 = vmatpush1.msra.mxu0 0.0
    %1428 = vmatprep.subr.mxu0 0.0
    %1429 = vmatpush1.msra.mxu0 0.0
    %1430 = vmatprep.mubr.f32.mxu0 0.0
    %1431 = vmatmul.mubr.f32.gmra.mrb[0].mxu0 %v1274
    %v1432 = vpop.f32.mrb[0].mxu0
    %v1433 = vadd.f32 0.0, %v1432
    %v1434 = vpop.f32.mrb[0].mxu0
    %v1435 = vadd.f32 0.0, %v1434
    %1436 = vdwg.mxu0
    %v1437 = vadd.f32 %v1291, %v1362
    %v1438 = vadd.f32 %v1292, %v1364
    %v1439 = vadd.f32 %v1293, %v1433
    %v1440 = vadd.f32 %v1294, %v1435
    %v1441 = vmul.f32 %v1437, 0.5
    %v1442 = vtanh.pop %v1441
    %v1443 = vmul.f32 %v1442, 0.5
    %v1444 = vadd.f32 %v1443, 0.5
    %v1445 = vmul.f32 %v1438, 0.5
    %v1446 = vtanh.pop %v1445
    %v1447 = vmul.f32 %v1446, 0.5
    %v1448 = vadd.f32 %v1447, 0.5
    %v1449 = vtanh.pop %v1439
    %v1450 = vmul.f32 %v1440, 0.5
    %v1451 = vtanh.pop %v1450
    %v1452 = vmul.f32 %v1451, 0.5
    %v1453 = vadd.f32 %v1452, 0.5
    %v1454 = vmul.f32 %v1448, %v1272
    %v1455 = vmul.f32 %v1444, %v1449
    %v1456 = vadd.f32 %v1454, %v1455
    %v1457 = vtanh.pop %v1456
    %v1458 = vmul.f32 %v1453, %v1457
    %v1459 = vrot.slane %v395, 5
    %v1460 = vrot.slane %v397, 5
    %v1461 = vrot.slane %v472, 5
    %v1462 = vrot.slane %v474, 5
    %v1467 = vrot.slane %v401, 4
    %v1468 = vrot.slane %v403, 4
    %v1469 = vrot.slane %v478, 4
    %v1470 = vrot.slane %v480, 4
    %v1475 = vsel %vm558, %v1459, %v1467
    %v1476 = vsel %vm558, %v1460, %v1468
    %v1477 = vsel %vm558, %v1461, %v1469
    %v1478 = vsel %vm558, %v1462, %v1470
    %1479 = vmatprep.subr.mxu0 %v483
    %1480 = vmatpush1.msra.mxu0 %v482
    %1481 = vmatprep.subr.mxu0 %v487
    %1482 = vmatpush1.msra.mxu0 %v486
    %1483 = vmatprep.subr.mxu0 %v491
    %1484 = vmatpush1.msra.mxu0 %v490
    %1485 = vmatprep.subr.mxu0 %v495
    %1486 = vmatpush1.msra.mxu0 %v494
    %1487 = vmatprep.subr.mxu0 %v499
    %1488 = vmatpush1.msra.mxu0 %v498
    %1489 = vmatprep.subr.mxu0 %v503
    %1490 = vmatpush1.msra.mxu0 %v502
    %1491 = vmatprep.subr.mxu0 %v507
    %1492 = vmatpush1.msra.mxu0 %v506
    %1493 = vmatprep.subr.mxu0 %v511
    %1494 = vmatpush1.msra.mxu0 %v510
    %1495 = vmatprep.subr.mxu0 %v515
    %1496 = vmatpush1.msra.mxu0 %v514
    %1497 = vmatprep.subr.mxu0 %v519
    %1498 = vmatpush1.msra.mxu0 %v518
    %1499 = vmatprep.subr.mxu0 %v523
    %1500 = vmatpush1.msra.mxu0 %v522
    %1501 = vmatprep.subr.mxu0 %v527
    %1502 = vmatpush1.msra.mxu0 %v526
    %1503 = vmatprep.subr.mxu0 %v531
    %1504 = vmatpush1.msra.mxu0 %v530
    %1505 = vmatprep.subr.mxu0 %v535
    %1506 = vmatpush1.msra.mxu0 %v534
    %1507 = vmatprep.subr.mxu0 %v539
    %1508 = vmatpush1.msra.mxu0 %v538
    %1509 = vmatprep.subr.mxu0 %v543
    %1510 = vmatpush1.msra.mxu0 %v542
    %1511 = vmatprep.subr.mxu0 0.0
    %1512 = vmatpush1.msra.mxu0 0.0
    %1513 = vmatprep.subr.mxu0 0.0
    %1514 = vmatpush1.msra.mxu0 0.0
    %1515 = vmatprep.subr.mxu0 0.0
    %1516 = vmatpush1.msra.mxu0 0.0
    %1517 = vmatprep.subr.mxu0 0.0
    %1518 = vmatpush1.msra.mxu0 0.0
    %1519 = vmatprep.subr.mxu0 0.0
    %1520 = vmatpush1.msra.mxu0 0.0
    %1521 = vmatprep.subr.mxu0 0.0
    %1522 = vmatpush1.msra.mxu0 0.0
    %1523 = vmatprep.subr.mxu0 0.0
    %1524 = vmatpush1.msra.mxu0 0.0
    %1525 = vmatprep.subr.mxu0 0.0
    %1526 = vmatpush1.msra.mxu0 0.0
    %1527 = vmatprep.subr.mxu0 0.0
    %1528 = vmatpush1.msra.mxu0 0.0
    %1529 = vmatprep.subr.mxu0 0.0
    %1530 = vmatpush1.msra.mxu0 0.0
    %1531 = vmatprep.subr.mxu0 0.0
    %1532 = vmatpush1.msra.mxu0 0.0
    %1533 = vmatprep.subr.mxu0 0.0
    %1534 = vmatpush1.msra.mxu0 0.0
    %1535 = vmatprep.subr.mxu0 0.0
    %1536 = vmatpush1.msra.mxu0 0.0
    %1537 = vmatprep.subr.mxu0 0.0
    %1538 = vmatpush1.msra.mxu0 0.0
    %1539 = vmatprep.subr.mxu0 0.0
    %1540 = vmatpush1.msra.mxu0 0.0
    %1541 = vmatprep.subr.mxu0 0.0
    %1542 = vmatpush1.msra.mxu0 0.0
    %1543 = vmatprep.mubr.f32.mxu0 0.0
    %1544 = vmatmul.mubr.f32.gmra.mrb[0].mxu0 %v1458
    %v1545 = vpop.f32.mrb[0].mxu0
    %v1546 = vadd.f32 0.0, %v1545
    %v1547 = vpop.f32.mrb[0].mxu0
    %v1548 = vadd.f32 0.0, %v1547
    %1549 = vdwg.mxu0
    %1550 = vmatprep.subr.mxu0 %v485
    %1551 = vmatpush1.msra.mxu0 %v484
    %1552 = vmatprep.subr.mxu0 %v489
    %1553 = vmatpush1.msra.mxu0 %v488
    %1554 = vmatprep.subr.mxu0 %v493
    %1555 = vmatpush1.msra.mxu0 %v492
    %1556 = vmatprep.subr.mxu0 %v497
    %1557 = vmatpush1.msra.mxu0 %v496
    %1558 = vmatprep.subr.mxu0 %v501
    %1559 = vmatpush1.msra.mxu0 %v500
    %1560 = vmatprep.subr.mxu0 %v505
    %1561 = vmatpush1.msra.mxu0 %v504
    %1562 = vmatprep.subr.mxu0 %v509
    %1563 = vmatpush1.msra.mxu0 %v508
    %1564 = vmatprep.subr.mxu0 %v513
    %1565 = vmatpush1.msra.mxu0 %v512
    %1566 = vmatprep.subr.mxu0 %v517
    %1567 = vmatpush1.msra.mxu0 %v516
    %1568 = vmatprep.subr.mxu0 %v521
    %1569 = vmatpush1.msra.mxu0 %v520
    %1570 = vmatprep.subr.mxu0 %v525
    %1571 = vmatpush1.msra.mxu0 %v524
    %1572 = vmatprep.subr.mxu0 %v529
    %1573 = vmatpush1.msra.mxu0 %v528
    %1574 = vmatprep.subr.mxu0 %v533
    %1575 = vmatpush1.msra.mxu0 %v532
    %1576 = vmatprep.subr.mxu0 %v537
    %1577 = vmatpush1.msra.mxu0 %v536
    %1578 = vmatprep.subr.mxu0 %v541
    %1579 = vmatpush1.msra.mxu0 %v540
    %1580 = vmatprep.subr.mxu0 %v545
    %1581 = vmatpush1.msra.mxu0 %v544
    %1582 = vmatprep.subr.mxu0 0.0
    %1583 = vmatpush1.msra.mxu0 0.0
    %1584 = vmatprep.subr.mxu0 0.0
    %1585 = vmatpush1.msra.mxu0 0.0
    %1586 = vmatprep.subr.mxu0 0.0
    %1587 = vmatpush1.msra.mxu0 0.0
    %1588 = vmatprep.subr.mxu0 0.0
    %1589 = vmatpush1.msra.mxu0 0.0
    %1590 = vmatprep.subr.mxu0 0.0
    %1591 = vmatpush1.msra.mxu0 0.0
    %1592 = vmatprep.subr.mxu0 0.0
    %1593 = vmatpush1.msra.mxu0 0.0
    %1594 = vmatprep.subr.mxu0 0.0
    %1595 = vmatpush1.msra.mxu0 0.0
    %1596 = vmatprep.subr.mxu0 0.0
    %1597 = vmatpush1.msra.mxu0 0.0
    %1598 = vmatprep.subr.mxu0 0.0
    %1599 = vmatpush1.msra.mxu0 0.0
    %1600 = vmatprep.subr.mxu0 0.0
    %1601 = vmatpush1.msra.mxu0 0.0
    %1602 = vmatprep.subr.mxu0 0.0
    %1603 = vmatpush1.msra.mxu0 0.0
    %1604 = vmatprep.subr.mxu0 0.0
    %1605 = vmatpush1.msra.mxu0 0.0
    %1606 = vmatprep.subr.mxu0 0.0
    %1607 = vmatpush1.msra.mxu0 0.0
    %1608 = vmatprep.subr.mxu0 0.0
    %1609 = vmatpush1.msra.mxu0 0.0
    %1610 = vmatprep.subr.mxu0 0.0
    %1611 = vmatpush1.msra.mxu0 0.0
    %1612 = vmatprep.subr.mxu0 0.0
    %1613 = vmatpush1.msra.mxu0 0.0
    %1614 = vmatprep.mubr.f32.mxu0 0.0
    %1615 = vmatmul.mubr.f32.gmra.mrb[0].mxu0 %v1458
    %v1616 = vpop.f32.mrb[0].mxu0
    %v1617 = vadd.f32 0.0, %v1616
    %v1618 = vpop.f32.mrb[0].mxu0
    %v1619 = vadd.f32 0.0, %v1618
    %1620 = vdwg.mxu0
    %v1621 = vadd.f32 %v1475, %v1546
    %v1622 = vadd.f32 %v1476, %v1548
    %v1623 = vadd.f32 %v1477, %v1617
    %v1624 = vadd.f32 %v1478, %v1619
    %v1625 = vmul.f32 %v1621, 0.5
    %v1626 = vtanh.pop %v1625
    %v1627 = vmul.f32 %v1626, 0.5
    %v1628 = vadd.f32 %v1627, 0.5
    %v1629 = vmul.f32 %v1622, 0.5
    %v1630 = vtanh.pop %v1629
    %v1631 = vmul.f32 %v1630, 0.5
    %v1632 = vadd.f32 %v1631, 0.5
    %v1633 = vtanh.pop %v1623
    %v1634 = vmul.f32 %v1624, 0.5
    %v1635 = vtanh.pop %v1634
    %v1636 = vmul.f32 %v1635, 0.5
    %v1637 = vadd.f32 %v1636, 0.5
    %v1638 = vmul.f32 %v1632, %v1456
    %v1639 = vmul.f32 %v1628, %v1633
    %v1640 = vadd.f32 %v1638, %v1639
    %v1641 = vtanh.pop %v1640
    %v1642 = vmul.f32 %v1637, %v1641
    %v1643 = vrot.slane %v395, 6
    %v1644 = vrot.slane %v397, 6
    %v1645 = vrot.slane %v472, 6
    %v1646 = vrot.slane %v474, 6
    %v1651 = vrot.slane %v401, 5
    %v1652 = vrot.slane %v403, 5
    %v1653 = vrot.slane %v478, 5
    %v1654 = vrot.slane %v480, 5
    %v1659 = vsel %vm558, %v1643, %v1651
    %v1660 = vsel %vm558, %v1644, %v1652
    %v1661 = vsel %vm558, %v1645, %v1653
    %v1662 = vsel %vm558, %v1646, %v1654
    %1663 = vmatprep.subr.mxu0 %v483
    %1664 = vmatpush1.msra.mxu0 %v482
    %1665 = vmatprep.subr.mxu0 %v487
    %1666 = vmatpush1.msra.mxu0 %v486
    %1667 = vmatprep.subr.mxu0 %v491
    %1668 = vmatpush1.msra.mxu0 %v490
    %1669 = vmatprep.subr.mxu0 %v495
    %1670 = vmatpush1.msra.mxu0 %v494
    %1671 = vmatprep.subr.mxu0 %v499
    %1672 = vmatpush1.msra.mxu0 %v498
    %1673 = vmatprep.subr.mxu0 %v503
    %1674 = vmatpush1.msra.mxu0 %v502
    %1675 = vmatprep.subr.mxu0 %v507
    %1676 = vmatpush1.msra.mxu0 %v506
    %1677 = vmatprep.subr.mxu0 %v511
    %1678 = vmatpush1.msra.mxu0 %v510
    %1679 = vmatprep.subr.mxu0 %v515
    %1680 = vmatpush1.msra.mxu0 %v514
    %1681 = vmatprep.subr.mxu0 %v519
    %1682 = vmatpush1.msra.mxu0 %v518
    %1683 = vmatprep.subr.mxu0 %v523
    %1684 = vmatpush1.msra.mxu0 %v522
    %1685 = vmatprep.subr.mxu0 %v527
    %1686 = vmatpush1.msra.mxu0 %v526
    %1687 = vmatprep.subr.mxu0 %v531
    %1688 = vmatpush1.msra.mxu0 %v530
    %1689 = vmatprep.subr.mxu0 %v535
    %1690 = vmatpush1.msra.mxu0 %v534
    %1691 = vmatprep.subr.mxu0 %v539
    %1692 = vmatpush1.msra.mxu0 %v538
    %1693 = vmatprep.subr.mxu0 %v543
    %1694 = vmatpush1.msra.mxu0 %v542
    %1695 = vmatprep.subr.mxu0 0.0
    %1696 = vmatpush1.msra.mxu0 0.0
    %1697 = vmatprep.subr.mxu0 0.0
    %1698 = vmatpush1.msra.mxu0 0.0
    %1699 = vmatprep.subr.mxu0 0.0
    %1700 = vmatpush1.msra.mxu0 0.0
    %1701 = vmatprep.subr.mxu0 0.0
    %1702 = vmatpush1.msra.mxu0 0.0
    %1703 = vmatprep.subr.mxu0 0.0
    %1704 = vmatpush1.msra.mxu0 0.0
    %1705 = vmatprep.subr.mxu0 0.0
    %1706 = vmatpush1.msra.mxu0 0.0
    %1707 = vmatprep.subr.mxu0 0.0
    %1708 = vmatpush1.msra.mxu0 0.0
    %1709 = vmatprep.subr.mxu0 0.0
    %1710 = vmatpush1.msra.mxu0 0.0
    %1711 = vmatprep.subr.mxu0 0.0
    %1712 = vmatpush1.msra.mxu0 0.0
    %1713 = vmatprep.subr.mxu0 0.0
    %1714 = vmatpush1.msra.mxu0 0.0
    %1715 = vmatprep.subr.mxu0 0.0
    %1716 = vmatpush1.msra.mxu0 0.0
    %1717 = vmatprep.subr.mxu0 0.0
    %1718 = vmatpush1.msra.mxu0 0.0
    %1719 = vmatprep.subr.mxu0 0.0
    %1720 = vmatpush1.msra.mxu0 0.0
    %1721 = vmatprep.subr.mxu0 0.0
    %1722 = vmatpush1.msra.mxu0 0.0
    %1723 = vmatprep.subr.mxu0 0.0
    %1724 = vmatpush1.msra.mxu0 0.0
    %1725 = vmatprep.subr.mxu0 0.0
    %1726 = vmatpush1.msra.mxu0 0.0
    %1727 = vmatprep.mubr.f32.mxu0 0.0
    %1728 = vmatmul.mubr.f32.gmra.mrb[0].mxu0 %v1642
    %v1729 = vpop.f32.mrb[0].mxu0
    %v1730 = vadd.f32 0.0, %v1729
    %v1731 = vpop.f32.mrb[0].mxu0
    %v1732 = vadd.f32 0.0, %v1731
    %1733 = vdwg.mxu0
    %1734 = vmatprep.subr.mxu0 %v485
    %1735 = vmatpush1.msra.mxu0 %v484
    %1736 = vmatprep.subr.mxu0 %v489
    %1737 = vmatpush1.msra.mxu0 %v488
    %1738 = vmatprep.subr.mxu0 %v493
    %1739 = vmatpush1.msra.mxu0 %v492
    %1740 = vmatprep.subr.mxu0 %v497
    %1741 = vmatpush1.msra.mxu0 %v496
    %1742 = vmatprep.subr.mxu0 %v501
    %1743 = vmatpush1.msra.mxu0 %v500
    %1744 = vmatprep.subr.mxu0 %v505
    %1745 = vmatpush1.msra.mxu0 %v504
    %1746 = vmatprep.subr.mxu0 %v509
    %1747 = vmatpush1.msra.mxu0 %v508
    %1748 = vmatprep.subr.mxu0 %v513
    %1749 = vmatpush1.msra.mxu0 %v512
    %1750 = vmatprep.subr.mxu0 %v517
    %1751 = vmatpush1.msra.mxu0 %v516
    %1752 = vmatprep.subr.mxu0 %v521
    %1753 = vmatpush1.msra.mxu0 %v520
    %1754 = vmatprep.subr.mxu0 %v525
    %1755 = vmatpush1.msra.mxu0 %v524
    %1756 = vmatprep.subr.mxu0 %v529
    %1757 = vmatpush1.msra.mxu0 %v528
    %1758 = vmatprep.subr.mxu0 %v533
    %1759 = vmatpush1.msra.mxu0 %v532
    %1760 = vmatprep.subr.mxu0 %v537
    %1761 = vmatpush1.msra.mxu0 %v536
    %1762 = vmatprep.subr.mxu0 %v541
    %1763 = vmatpush1.msra.mxu0 %v540
    %1764 = vmatprep.subr.mxu0 %v545
    %1765 = vmatpush1.msra.mxu0 %v544
    %1766 = vmatprep.subr.mxu0 0.0
    %1767 = vmatpush1.msra.mxu0 0.0
    %1768 = vmatprep.subr.mxu0 0.0
    %1769 = vmatpush1.msra.mxu0 0.0
    %1770 = vmatprep.subr.mxu0 0.0
    %1771 = vmatpush1.msra.mxu0 0.0
    %1772 = vmatprep.subr.mxu0 0.0
    %1773 = vmatpush1.msra.mxu0 0.0
    %1774 = vmatprep.subr.mxu0 0.0
    %1775 = vmatpush1.msra.mxu0 0.0
    %1776 = vmatprep.subr.mxu0 0.0
    %1777 = vmatpush1.msra.mxu0 0.0
    %1778 = vmatprep.subr.mxu0 0.0
    %1779 = vmatpush1.msra.mxu0 0.0
    %1780 = vmatprep.subr.mxu0 0.0
    %1781 = vmatpush1.msra.mxu0 0.0
    %1782 = vmatprep.subr.mxu0 0.0
    %1783 = vmatpush1.msra.mxu0 0.0
    %1784 = vmatprep.subr.mxu0 0.0
    %1785 = vmatpush1.msra.mxu0 0.0
    %1786 = vmatprep.subr.mxu0 0.0
    %1787 = vmatpush1.msra.mxu0 0.0
    %1788 = vmatprep.subr.mxu0 0.0
    %1789 = vmatpush1.msra.mxu0 0.0
    %1790 = vmatprep.subr.mxu0 0.0
    %1791 = vmatpush1.msra.mxu0 0.0
    %1792 = vmatprep.subr.mxu0 0.0
    %1793 = vmatpush1.msra.mxu0 0.0
    %1794 = vmatprep.subr.mxu0 0.0
    %1795 = vmatpush1.msra.mxu0 0.0
    %1796 = vmatprep.subr.mxu0 0.0
    %1797 = vmatpush1.msra.mxu0 0.0
    %1798 = vmatprep.mubr.f32.mxu0 0.0
    %1799 = vmatmul.mubr.f32.gmra.mrb[0].mxu0 %v1642
    %v1800 = vpop.f32.mrb[0].mxu0
    %v1801 = vadd.f32 0.0, %v1800
    %v1802 = vpop.f32.mrb[0].mxu0
    %v1803 = vadd.f32 0.0, %v1802
    %1804 = vdwg.mxu0
    %v1805 = vadd.f32 %v1659, %v1730
    %v1806 = vadd.f32 %v1660, %v1732
    %v1807 = vadd.f32 %v1661, %v1801
    %v1808 = vadd.f32 %v1662, %v1803
    %v1809 = vmul.f32 %v1805, 0.5
    %v1810 = vtanh.pop %v1809
    %v1811 = vmul.f32 %v1810, 0.5
    %v1812 = vadd.f32 %v1811, 0.5
    %v1813 = vmul.f32 %v1806, 0.5
    %v1814 = vtanh.pop %v1813
    %v1815 = vmul.f32 %v1814, 0.5
    %v1816 = vadd.f32 %v1815, 0.5
    %v1817 = vtanh.pop %v1807
    %v1818 = vmul.f32 %v1808, 0.5
    %v1819 = vtanh.pop %v1818
    %v1820 = vmul.f32 %v1819, 0.5
    %v1821 = vadd.f32 %v1820, 0.5
    %v1822 = vmul.f32 %v1816, %v1640
    %v1823 = vmul.f32 %v1812, %v1817
    %v1824 = vadd.f32 %v1822, %v1823
    %v1825 = vtanh.pop %v1824
    %v1826 = vmul.f32 %v1821, %v1825
    %v1827 = vrot.slane %v395, 7
    %v1828 = vrot.slane %v397, 7
    %v1829 = vrot.slane %v472, 7
    %v1830 = vrot.slane %v474, 7
    %v1835 = vrot.slane %v401, 6
    %v1836 = vrot.slane %v403, 6
    %v1837 = vrot.slane %v478, 6
    %v1838 = vrot.slane %v480, 6
    %v1843 = vsel %vm558, %v1827, %v1835
    %v1844 = vsel %vm558, %v1828, %v1836
    %v1845 = vsel %vm558, %v1829, %v1837
    %v1846 = vsel %vm558, %v1830, %v1838
    %1847 = vmatprep.subr.mxu0 %v483
    %1848 = vmatpush1.msra.mxu0 %v482
    %1849 = vmatprep.subr.mxu0 %v487
    %1850 = vmatpush1.msra.mxu0 %v486
    %1851 = vmatprep.subr.mxu0 %v491
    %1852 = vmatpush1.msra.mxu0 %v490
    %1853 = vmatprep.subr.mxu0 %v495
    %1854 = vmatpush1.msra.mxu0 %v494
    %1855 = vmatprep.subr.mxu0 %v499
    %1856 = vmatpush1.msra.mxu0 %v498
    %1857 = vmatprep.subr.mxu0 %v503
    %1858 = vmatpush1.msra.mxu0 %v502
    %1859 = vmatprep.subr.mxu0 %v507
    %1860 = vmatpush1.msra.mxu0 %v506
    %1861 = vmatprep.subr.mxu0 %v511
    %1862 = vmatpush1.msra.mxu0 %v510
    %1863 = vmatprep.subr.mxu0 %v515
    %1864 = vmatpush1.msra.mxu0 %v514
    %1865 = vmatprep.subr.mxu0 %v519
    %1866 = vmatpush1.msra.mxu0 %v518
    %1867 = vmatprep.subr.mxu0 %v523
    %1868 = vmatpush1.msra.mxu0 %v522
    %1869 = vmatprep.subr.mxu0 %v527
    %1870 = vmatpush1.msra.mxu0 %v526
    %1871 = vmatprep.subr.mxu0 %v531
    %1872 = vmatpush1.msra.mxu0 %v530
    %1873 = vmatprep.subr.mxu0 %v535
    %1874 = vmatpush1.msra.mxu0 %v534
    %1875 = vmatprep.subr.mxu0 %v539
    %1876 = vmatpush1.msra.mxu0 %v538
    %1877 = vmatprep.subr.mxu0 %v543
    %1878 = vmatpush1.msra.mxu0 %v542
    %1879 = vmatprep.subr.mxu0 0.0
    %1880 = vmatpush1.msra.mxu0 0.0
    %1881 = vmatprep.subr.mxu0 0.0
    %1882 = vmatpush1.msra.mxu0 0.0
    %1883 = vmatprep.subr.mxu0 0.0
    %1884 = vmatpush1.msra.mxu0 0.0
    %1885 = vmatprep.subr.mxu0 0.0
    %1886 = vmatpush1.msra.mxu0 0.0
    %1887 = vmatprep.subr.mxu0 0.0
    %1888 = vmatpush1.msra.mxu0 0.0
    %1889 = vmatprep.subr.mxu0 0.0
    %1890 = vmatpush1.msra.mxu0 0.0
    %1891 = vmatprep.subr.mxu0 0.0
    %1892 = vmatpush1.msra.mxu0 0.0
    %1893 = vmatprep.subr.mxu0 0.0
    %1894 = vmatpush1.msra.mxu0 0.0
    %1895 = vmatprep.subr.mxu0 0.0
    %1896 = vmatpush1.msra.mxu0 0.0
    %1897 = vmatprep.subr.mxu0 0.0
    %1898 = vmatpush1.msra.mxu0 0.0
    %1899 = vmatprep.subr.mxu0 0.0
    %1900 = vmatpush1.msra.mxu0 0.0
    %1901 = vmatprep.subr.mxu0 0.0
    %1902 = vmatpush1.msra.mxu0 0.0
    %1903 = vmatprep.subr.mxu0 0.0
    %1904 = vmatpush1.msra.mxu0 0.0
    %1905 = vmatprep.subr.mxu0 0.0
    %1906 = vmatpush1.msra.mxu0 0.0
    %1907 = vmatprep.subr.mxu0 0.0
    %1908 = vmatpush1.msra.mxu0 0.0
    %1909 = vmatprep.subr.mxu0 0.0
    %1910 = vmatpush1.msra.mxu0 0.0
    %1911 = vmatprep.mubr.f32.mxu0 0.0
    %1912 = vmatmul.mubr.f32.gmra.mrb[0].mxu0 %v1826
    %v1913 = vpop.f32.mrb[0].mxu0
    %v1914 = vadd.f32 0.0, %v1913
    %v1915 = vpop.f32.mrb[0].mxu0
    %v1916 = vadd.f32 0.0, %v1915
    %1917 = vdwg.mxu0
    %1918 = vmatprep.subr.mxu0 %v485
    %1919 = vmatpush1.msra.mxu0 %v484
    %1920 = vmatprep.subr.mxu0 %v489
    %1921 = vmatpush1.msra.mxu0 %v488
    %1922 = vmatprep.subr.mxu0 %v493
    %1923 = vmatpush1.msra.mxu0 %v492
    %1924 = vmatprep.subr.mxu0 %v497
    %1925 = vmatpush1.msra.mxu0 %v496
    %1926 = vmatprep.subr.mxu0 %v501
    %1927 = vmatpush1.msra.mxu0 %v500
    %1928 = vmatprep.subr.mxu0 %v505
    %1929 = vmatpush1.msra.mxu0 %v504
    %1930 = vmatprep.subr.mxu0 %v509
    %1931 = vmatpush1.msra.mxu0 %v508
    %1932 = vmatprep.subr.mxu0 %v513
    %1933 = vmatpush1.msra.mxu0 %v512
    %1934 = vmatprep.subr.mxu0 %v517
    %1935 = vmatpush1.msra.mxu0 %v516
    %1936 = vmatprep.subr.mxu0 %v521
    %1937 = vmatpush1.msra.mxu0 %v520
    %1938 = vmatprep.subr.mxu0 %v525
    %1939 = vmatpush1.msra.mxu0 %v524
    %1940 = vmatprep.subr.mxu0 %v529
    %1941 = vmatpush1.msra.mxu0 %v528
    %1942 = vmatprep.subr.mxu0 %v533
    %1943 = vmatpush1.msra.mxu0 %v532
    %1944 = vmatprep.subr.mxu0 %v537
    %1945 = vmatpush1.msra.mxu0 %v536
    %1946 = vmatprep.subr.mxu0 %v541
    %1947 = vmatpush1.msra.mxu0 %v540
    %1948 = vmatprep.subr.mxu0 %v545
    %1949 = vmatpush1.msra.mxu0 %v544
    %1950 = vmatprep.subr.mxu0 0.0
    %1951 = vmatpush1.msra.mxu0 0.0
    %1952 = vmatprep.subr.mxu0 0.0
    %1953 = vmatpush1.msra.mxu0 0.0
    %1954 = vmatprep.subr.mxu0 0.0
    %1955 = vmatpush1.msra.mxu0 0.0
    %1956 = vmatprep.subr.mxu0 0.0
    %1957 = vmatpush1.msra.mxu0 0.0
    %1958 = vmatprep.subr.mxu0 0.0
    %1959 = vmatpush1.msra.mxu0 0.0
    %1960 = vmatprep.subr.mxu0 0.0
    %1961 = vmatpush1.msra.mxu0 0.0
    %1962 = vmatprep.subr.mxu0 0.0
    %1963 = vmatpush1.msra.mxu0 0.0
    %1964 = vmatprep.subr.mxu0 0.0
    %1965 = vmatpush1.msra.mxu0 0.0
    %1966 = vmatprep.subr.mxu0 0.0
    %1967 = vmatpush1.msra.mxu0 0.0
    %1968 = vmatprep.subr.mxu0 0.0
    %1969 = vmatpush1.msra.mxu0 0.0
    %1970 = vmatprep.subr.mxu0 0.0
    %1971 = vmatpush1.msra.mxu0 0.0
    %1972 = vmatprep.subr.mxu0 0.0
    %1973 = vmatpush1.msra.mxu0 0.0
    %1974 = vmatprep.subr.mxu0 0.0
    %1975 = vmatpush1.msra.mxu0 0.0
    %1976 = vmatprep.subr.mxu0 0.0
    %1977 = vmatpush1.msra.mxu0 0.0
    %1978 = vmatprep.subr.mxu0 0.0
    %1979 = vmatpush1.msra.mxu0 0.0
    %1980 = vmatprep.subr.mxu0 0.0
    %1981 = vmatpush1.msra.mxu0 0.0
    %1982 = vmatprep.mubr.f32.mxu0 0.0
    %1983 = vmatmul.mubr.f32.gmra.mrb[0].mxu0 %v1826
    %v1984 = vpop.f32.mrb[0].mxu0
    %v1985 = vadd.f32 0.0, %v1984
    %v1986 = vpop.f32.mrb[0].mxu0
    %v1987 = vadd.f32 0.0, %v1986
    %1988 = vdwg.mxu0
    %v1989 = vadd.f32 %v1843, %v1914
    %v1990 = vadd.f32 %v1844, %v1916
    %v1991 = vadd.f32 %v1845, %v1985
    %v1992 = vadd.f32 %v1846, %v1987
    %v1993 = vmul.f32 %v1989, 0.5
    %v1994 = vtanh.pop %v1993
    %v1995 = vmul.f32 %v1994, 0.5
    %v1996 = vadd.f32 %v1995, 0.5
    %v1997 = vmul.f32 %v1990, 0.5
    %v1998 = vtanh.pop %v1997
    %v1999 = vmul.f32 %v1998, 0.5
    %v2000 = vadd.f32 %v1999, 0.5
    %v2001 = vtanh.pop %v1991
    %v2002 = vmul.f32 %v1992, 0.5
    %v2003 = vtanh.pop %v2002
    %v2004 = vmul.f32 %v2003, 0.5
    %v2005 = vadd.f32 %v2004, 0.5
    %v2006 = vmul.f32 %v2000, %v1824
    %v2007 = vmul.f32 %v1996, %v2001
    %v2008 = vadd.f32 %v2006, %v2007
    %v2009 = vtanh.pop %v2008
    %v2010 = vmul.f32 %v2005, %v2009
    %v2012 = vrot.slane %v906, 7
    %v2015 = vrot.slane %v1090, 6
    %v2018 = vrot.slane %v1274, 5
    %v2021 = vrot.slane %v1458, 4
    %v2024 = vrot.slane %v1642, 3
    %v2027 = vrot.slane %v1826, 2
    %v2030 = vrot.slane %v2010, 1
    %v2033 = vrot.slane %v726, 1
    %v2035 = vrot.slane %v1090, 7
    %v2037 = vrot.slane %v1274, 6
    %v2039 = vrot.slane %v1458, 5
    %v2041 = vrot.slane %v1642, 4
    %v2043 = vrot.slane %v1826, 3
    %v2045 = vrot.slane %v2010, 2
    %v2047 = vsel %vm558, %v726, %v2012
    %vm2048 = vcmask 1041408
    %v2049 = vsel %vm2048, %v2047, %v2015
    %vm2050 = vcmask 1042432
    %v2051 = vsel %vm2050, %v2049, %v2018
    %vm2052 = vcmask 1043456
    %v2053 = vsel %vm2052, %v2051, %v2021
    %vm2054 = vcmask 1044480
    %v2055 = vsel %vm2054, %v2053, %v2024
    %vm2056 = vcmask 1045504
    %v2057 = vsel %vm2056, %v2055, %v2027
    %vm2058 = vcmask 1046528
    %v2059 = vsel %vm2058, %v2057, %v2030
    %v2060 = vsel %vm558, %v2033, %v906
    %v2061 = vsel %vm2048, %v2060, %v2035
    %v2062 = vsel %vm2050, %v2061, %v2037
    %v2063 = vsel %vm2052, %v2062, %v2039
    %v2064 = vsel %vm2054, %v2063, %v2041
    %v2065 = vsel %vm2056, %v2064, %v2043
    %v2066 = vsel %vm2058, %v2065, %v2045
    %v2067 = vld [vmem:[%s7] sm:$0x1]
    %v2068 = vld [vmem:[%s8] sm:$0x1]
    %2069 = vadd.xlane.f32.xlu0 %v2059
    %v2070 = vpop.xlane.xlu0 %2069
    %2071 = vadd.xlane.f32.xlu0 %v2066
    %v2072 = vpop.xlane.xlu0 %2071
    %v2073 = vmul.f32 %v2070, %v207
    %v2074 = vmul.f32 %v2072, %v207
    %v2075 = vsub.f32 %v2059, %v2073
    %v2076 = vsub.f32 %v2066, %v2074
    %v2077 = vmul.f32 %v2075, %v2075
    %v2078 = vmul.f32 %v2076, %v2076
    %2079 = vadd.xlane.f32.xlu0 %v2077
    %v2080 = vpop.xlane.xlu0 %2079
    %2081 = vadd.xlane.f32.xlu0 %v2078
    %v2082 = vpop.xlane.xlu0 %2081
    %v2083 = vmul.f32 %v2080, %v207
    %v2084 = vmul.f32 %v2082, %v207
    %v2085 = vadd.f32 %v2083, 1e-05
    %v2086 = vadd.f32 %v2084, 1e-05
    %v2087 = vrsqrt.pop %v2085
    %v2088 = vrsqrt.pop %v2086
    %v2089 = vmul.f32 %v2075, %v2087
    %v2090 = vmul.f32 %v2076, %v2088
    %v2092 = vlaneseq
    %v2093 = vshrl.u32 %v2092, 7
    %v2094 = vsub.s32 0, %v2093
    %v2095 = vrot.slane %v2067, %v2094
    %v2097 = vmul.f32 %v2089, %v2095
    %v2098 = vmul.f32 %v2090, %v2095
    %v2100 = vlaneseq
    %v2101 = vshrl.u32 %v2100, 7
    %v2102 = vsub.s32 0, %v2101
    %v2103 = vrot.slane %v2068, %v2102
    %v2105 = vadd.f32 %v2097, %v2103
    %v2106 = vadd.f32 %v2098, %v2103
    %v2107 = vld [vmem:[#allocation8] sm:$0xff]
    %v2108 = vld [vmem:[#allocation8 + $0x8] sm:$0xff]
    %v2109 = vld [vmem:[#allocation8 + $0x10] sm:$0xff]
    %v2110 = vld [vmem:[#allocation8 + $0x18] sm:$0xff]
    %v2111 = vld [vmem:[#allocation8 + $0x20] sm:$0xff]
    %v2112 = vld [vmem:[#allocation8 + $0x28] sm:$0xff]
    %v2113 = vld [vmem:[#allocation8 + $0x30] sm:$0xff]
    %v2114 = vld [vmem:[#allocation8 + $0x38] sm:$0xff]
    %v2115 = vld [vmem:[#allocation8 + $0x40] sm:$0xff]
    %v2116 = vld [vmem:[#allocation8 + $0x48] sm:$0xff]
    %v2117 = vld [vmem:[#allocation8 + $0x50] sm:$0xff]
    %v2118 = vld [vmem:[#allocation8 + $0x58] sm:$0xff]
    %v2119 = vld [vmem:[#allocation8 + $0x60] sm:$0xff]
    %v2120 = vld [vmem:[#allocation8 + $0x68] sm:$0xff]
    %v2121 = vld [vmem:[#allocation8 + $0x70] sm:$0xff]
    %v2122 = vld [vmem:[#allocation8 + $0x78] sm:$0xff]
    %v2123 = vld [vmem:[%s10] sm:$0x1]
    %v2125 = vlaneseq
    %v2126 = vshrl.u32 %v2125, 7
    %v2127 = vsub.s32 0, %v2126
    %v2128 = vrot.slane %v2123, %v2127
    %2130 = vmatprep.subr.mxu0 0.0
    %2131 = vmatpush1.msra.mxu0 %v2107
    %2132 = vmatprep.subr.mxu0 0.0
    %2133 = vmatpush1.msra.mxu0 %v2108
    %2134 = vmatprep.subr.mxu0 0.0
    %2135 = vmatpush1.msra.mxu0 %v2109
    %2136 = vmatprep.subr.mxu0 0.0
    %2137 = vmatpush1.msra.mxu0 %v2110
    %2138 = vmatprep.subr.mxu0 0.0
    %2139 = vmatpush1.msra.mxu0 %v2111
    %2140 = vmatprep.subr.mxu0 0.0
    %2141 = vmatpush1.msra.mxu0 %v2112
    %2142 = vmatprep.subr.mxu0 0.0
    %2143 = vmatpush1.msra.mxu0 %v2113
    %2144 = vmatprep.subr.mxu0 0.0
    %2145 = vmatpush1.msra.mxu0 %v2114
    %2146 = vmatprep.subr.mxu0 0.0
    %2147 = vmatpush1.msra.mxu0 %v2115
    %2148 = vmatprep.subr.mxu0 0.0
    %2149 = vmatpush1.msra.mxu0 %v2116
    %2150 = vmatprep.subr.mxu0 0.0
    %2151 = vmatpush1.msra.mxu0 %v2117
    %2152 = vmatprep.subr.mxu0 0.0
    %2153 = vmatpush1.msra.mxu0 %v2118
    %2154 = vmatprep.subr.mxu0 0.0
    %2155 = vmatpush1.msra.mxu0 %v2119
    %2156 = vmatprep.subr.mxu0 0.0
    %2157 = vmatpush1.msra.mxu0 %v2120
    %2158 = vmatprep.subr.mxu0 0.0
    %2159 = vmatpush1.msra.mxu0 %v2121
    %2160 = vmatprep.subr.mxu0 0.0
    %2161 = vmatpush1.msra.mxu0 %v2122
    %2162 = vmatprep.subr.mxu0 0.0
    %2163 = vmatpush1.msra.mxu0 0.0
    %2164 = vmatprep.subr.mxu0 0.0
    %2165 = vmatpush1.msra.mxu0 0.0
    %2166 = vmatprep.subr.mxu0 0.0
    %2167 = vmatpush1.msra.mxu0 0.0
    %2168 = vmatprep.subr.mxu0 0.0
    %2169 = vmatpush1.msra.mxu0 0.0
    %2170 = vmatprep.subr.mxu0 0.0
    %2171 = vmatpush1.msra.mxu0 0.0
    %2172 = vmatprep.subr.mxu0 0.0
    %2173 = vmatpush1.msra.mxu0 0.0
    %2174 = vmatprep.subr.mxu0 0.0
    %2175 = vmatpush1.msra.mxu0 0.0
    %2176 = vmatprep.subr.mxu0 0.0
    %2177 = vmatpush1.msra.mxu0 0.0
    %2178 = vmatprep.subr.mxu0 0.0
    %2179 = vmatpush1.msra.mxu0 0.0
    %2180 = vmatprep.subr.mxu0 0.0
    %2181 = vmatpush1.msra.mxu0 0.0
    %2182 = vmatprep.subr.mxu0 0.0
    %2183 = vmatpush1.msra.mxu0 0.0
    %2184 = vmatprep.subr.mxu0 0.0
    %2185 = vmatpush1.msra.mxu0 0.0
    %2186 = vmatprep.subr.mxu0 0.0
    %2187 = vmatpush1.msra.mxu0 0.0
    %2188 = vmatprep.subr.mxu0 0.0
    %2189 = vmatpush1.msra.mxu0 0.0
    %2190 = vmatprep.subr.mxu0 0.0
    %2191 = vmatpush1.msra.mxu0 0.0
    %2192 = vmatprep.subr.mxu0 0.0
    %2193 = vmatpush1.msra.mxu0 0.0
    %2194 = vmatprep.mubr.f32.mxu0 0.0
    %2195 = vmatmul.mubr.f32.gmra.mrb[0].mxu0 %v2105
    %v2196 = vpop.f32.mrb[0].mxu0
    %v2197 = vadd.f32 %v2128, %v2196
    %v2198 = vpop.f32.mrb[0].mxu0
    %2199 = vmatprep.mubr.f32.mxu0 0.0
    %2200 = vmatmul.mubr.f32.gmra.mrb[0].mxu0 %v2106
    %v2201 = vpop.f32.mrb[0].mxu0
    %v2202 = vadd.f32 %v2128, %v2201
    %v2203 = vpop.f32.mrb[0].mxu0
    %2204 = vdwg.mxu0
    %2205 = vst [vmem:[#allocation10] sm:$0xff] %v2197
    %2206 = vst [vmem:[#allocation10 + $0x8] sm:$0xff] %v2202
    // Predicated region
    $region62: #{rnn_model_forward.1} parent=1 // pred_check
      _
    $region63: #{rnn_model_forward.1} parent=1 // pred_check_branch
      %2208 = sbr.rel (0) target = $region65
    $region64: #{rnn_model_forward.1} parent=1 // pred_region
      %s2210 = ssub.s32 256, 256
      %2211 = vsyncadd [#allocation4], %s2210
      %s2212 = sshll.u32 [#allocation10], 4
      %s2213 = int_to_ptr.vmem [resolvable:$true] %s2212
      %2218 = dma.vmem_to_hbm [thread:$0]  %s2213, 256, %s11, [#allocation4], 128, 128, 8
    $region65: #{rnn_model_forward.1} parent=1 // pred_fallthru
      _
    // Predicated region
    $region66: #{rnn_model_forward.1} parent=1 // pred_check
      _
    $region67: #{rnn_model_forward.1} parent=1 // pred_check_branch
      %2220 = sbr.rel (0) target = $region69
    $region68: #{rnn_model_forward.1} parent=1 // pred_region
      %2221 = dma.done [#allocation4], 256
    $region69: #{rnn_model_forward.1} parent=1 // pred_fallthru
      _
    %2222 = vsyncpa [#allocation3], 1
    %2223 = vsyncpa [#allocation6], 1
    %2224 = vsyncpa [#allocation9], 1
    %2225 = vsyncpa [#allocation4], 1

</llo_original>
